<compile_context>
chip_gen: v5e
topology: v5e:2x2
jax: 0.10.0
libtpu: 0.0.40
codegen_flags: <defaults>
</compile_context>

<pallas_src>
import functools

import jax
import jax.numpy as jnp
from jax import lax
from jax.experimental import pallas as pl
from jax.experimental.pallas import tpu as pltpu


# ----------------------------------------------------------------------------
# helpers
# ----------------------------------------------------------------------------
def _recip(d):
    """1/d via EUP approx reciprocal + one Newton-Raphson refinement.

    The approx reciprocal runs in the EUP slot (off the VALU critical path);
    one NR step squares its relative error (~2^-12 -> ~1e-7), keeping the
    multiplicative-update math within the reference tolerance.
    """
    r = pl.reciprocal(d, approx=True)
    return r * (2.0 - d * r)


def _choose_tb(BS, D, N, R, itemsize=4, budget_bytes=40 * 1024 * 1024):
    """Pick how many (D, N) slabs to process per grid step.

    Budget: double-buffered x/bases/out blocks + in-kernel f32 working set,
    kept under ~40 MiB so it fits v7x's 64 MiB VMEM per TensorCore (and the
    explicit 48 MiB vmem_limit_bytes below).  Also keep the grid >= 2 steps so
    both v7x TensorCores get work ("parallel" grid axis).
    """
    per_slab = (2 * (2 * D * N + D * R)) * itemsize \
        + (2 * D * N + 6 * R * N + 4 * R * R + 2 * D * R) * 4 + 4096
    max_tb = max(1, budget_bytes // max(per_slab, 1))
    if BS >= 2:
        max_tb = min(max_tb, max(1, BS // 2))
    max_tb = min(max_tb, BS)
    tb = 1
    for cand in range(1, int(max_tb) + 1):   # largest divisor of BS within budget
        if BS % cand == 0:
            tb = cand
    return tb


# ----------------------------------------------------------------------------
# Pallas kernel: TB independent per-batch NMF matrix decompositions per step
#   x      : (TB, D, N)
#   bases0 : (TB, D, R)   (initial bases, already L2-normalized along D)
#   out    : (TB, D, N) = bases @ coef^T  after `steps` multiplicative updates
# ----------------------------------------------------------------------------
def _md_nmf_kernel(x_ref, bases_ref, out_ref, *, steps, inv_t, eps):
    x = x_ref[...].astype(jnp.float32)          # (TB, D, N)
    bases = bases_ref[...].astype(jnp.float32)  # (TB, D, R)

    def bt_x(b):                                # bases^T @ x -> (TB, R, N)
        return jnp.einsum('bdr,bdn->brn', b, x,
                          preferred_element_type=jnp.float32)

    # local_inference: coefT = softmax over R of inv_t * (bases^T @ x)
    logits = inv_t * bt_x(bases)                              # (TB, R, N)
    logits = logits - jnp.max(logits, axis=1, keepdims=True)
    e = jnp.exp(logits)
    coef = e * _recip(jnp.sum(e, axis=1, keepdims=True))      # coefT (TB, R, N)

    def coef_update(bases, coef):
        # torch: coef = coef * (x^T @ bases) / (coef @ (bases^T @ bases) + eps)
        # transposed (lane-dense) layout; btb is exactly symmetric.
        numer = bt_x(bases)                                    # (TB, R, N)
        btb = jnp.einsum('bdr,bdk->brk', bases, bases,
                         preferred_element_type=jnp.float32)   # (TB, R, R)
        denom = jnp.einsum('brk,bkn->brn', btb, coef,
                           preferred_element_type=jnp.float32)  # (TB, R, N)
        return coef * numer * _recip(denom + eps)

    def one_step(carry):
        bases, coef = carry
        coef = coef_update(bases, coef)
        # torch: bases = bases * (x @ coef) / (bases @ (coef^T @ coef) + eps)
        numer = jnp.einsum('bdn,brn->bdr', x, coef,
                           preferred_element_type=jnp.float32)  # (TB, D, R)
        ctc = jnp.einsum('brn,bkn->brk', coef, coef,
                         preferred_element_type=jnp.float32)    # (TB, R, R)
        denom = jnp.einsum('bdr,brk->bdk', bases, ctc,
                           preferred_element_type=jnp.float32)  # (TB, D, R)
        bases = bases * numer * _recip(denom + eps)
        return bases, coef

    if steps <= 4:
        # short fixed trip count: static unroll keeps the LLO schedule visible
        for _ in range(steps):
            bases, coef = one_step((bases, coef))
    else:
        bases, coef = lax.fori_loop(0, steps, lambda _, c: one_step(c),
                                    (bases, coef))

    # compute_coef: one more multiplicative coef update (grad path in torch)
    coef = coef_update(bases, coef)

    # x_recon = bases @ coef^T == bases @ coefT -> (TB, D, N), lane-dense store
    recon = jnp.einsum('bdr,brn->bdn', bases, coef,
                       preferred_element_type=jnp.float32)
    out_ref[...] = recon.astype(out_ref.dtype)


def _run_md_kernel(xr, bases, *, steps, inv_t, eps, tb=None):
    BS, D, N = xr.shape
    R = bases.shape[-1]
    if tb is None:
        tb = _choose_tb(BS, D, N, R, jnp.dtype(xr.dtype).itemsize)
    assert BS % tb == 0, (BS, tb)
    kernel = functools.partial(_md_nmf_kernel, steps=int(steps),
                               inv_t=float(inv_t), eps=float(eps))
    return pl.pallas_call(
        kernel,
        out_shape=jax.ShapeDtypeStruct((BS, D, N), jnp.float32),
        grid_spec=pltpu.PrefetchScalarGridSpec(
            num_scalar_prefetch=0,
            grid=(BS // tb,),
            in_specs=[
                pl.BlockSpec((tb, D, N), lambda b: (b, 0, 0)),
                pl.BlockSpec((tb, D, R), lambda b: (b, 0, 0)),
            ],
            out_specs=pl.BlockSpec((tb, D, N), lambda b: (b, 0, 0)),
        ),
        compiler_params=pltpu.CompilerParams(
            dimension_semantics=("parallel",),
            # 48 MiB works on every generation (v7x has only 64 MiB VMEM per TC)
            vmem_limit_bytes=48 * 1024 * 1024,
        ),
    )(xr, bases)


# ----------------------------------------------------------------------------
# Wrapper reproducing _MatrixDecompositionBase.forward (rand_init=True path)
# ----------------------------------------------------------------------------
def matrix_decomposition_forward(x, key, *, dim='3D', S=1, R=8, steps=4,
                                 inv_t=1.0, eps=1e-6):
    x = x.astype(jnp.float32)
    if dim == '3D':
        B, C, T, H, W = x.shape
        D = T // S
        N = C * H * W
        xr = jnp.reshape(x, (B * S, D, N))
        out_shape = (B, C, T, H, W)
    elif dim == '2D':
        B, C, H, W = x.shape
        D = C // S
        N = H * W
        xr = jnp.reshape(x, (B * S, D, N))
        out_shape = (B, C, H, W)
    elif dim == '1D':
        B, C, L = x.shape
        D = L // S
        N = C
        xr = jnp.reshape(x, (B * S, D, N))
        out_shape = (B, C, L)
    else:
        raise ValueError("Dimension not supported")
    # TODO(synk): '2D_TSM' mode and the rand_init=False online_update buffer path
    # are stateful / config-dependent and not exercised here.

    BS = xr.shape[0]
    # _build_bases (NMF): uniform random, L2-normalized along D (rand_init=True)
    bases = jax.random.uniform(key, (BS, D, R), dtype=jnp.float32)
    norm = jnp.sqrt(jnp.sum(bases * bases, axis=1, keepdims=True))
    bases = bases / jnp.maximum(norm, 1e-12)

    out = _run_md_kernel(xr, bases, steps=steps, inv_t=inv_t, eps=eps)
    return jnp.reshape(out, out_shape)


# ----------------------------------------------------------------------------
# Pure-JAX reference (same math as torch, exact divides) for correctness check
# ----------------------------------------------------------------------------
def _reference(xr, bases, *, steps, inv_t, eps):
    coef = jax.nn.softmax(inv_t * jnp.einsum('bdn,bdr->bnr', xr, bases), axis=-1)
    for _ in range(steps):
        numer = jnp.einsum('bdn,bdr->bnr', xr, bases)
        denom = jnp.einsum('bnr,brk->bnk', coef,
                           jnp.einsum('bdr,bdk->brk', bases, bases))
        coef = coef * numer / (denom + eps)
        numer = jnp.einsum('bdn,bnr->bdr', xr, coef)
        denom = jnp.einsum('bdr,brk->bdk', bases,
                           jnp.einsum('bnr,bnk->brk', coef, coef))
        bases = bases * numer / (denom + eps)
    numer = jnp.einsum('bdn,bdr->bnr', xr, bases)
    denom = jnp.einsum('bnr,brk->bnk', coef,
                       jnp.einsum('bdr,bdk->brk', bases, bases))
    coef = coef * numer / (denom + eps)
    return jnp.einsum('bdr,bnr->bdn', bases, coef)


if __name__ == "__main__":
    # md_config-equivalent: MD_S=1, MD_R=8, MD_STEPS=4, INV_T=1, RAND_INIT=True
    B, C, T, H, W = 2, 4, 8, 8, 8
    S, R, STEPS, INV_T, EPS = 1, 8, 4, 1.0, 1e-6

    key = jax.random.PRNGKey(0)
    kx, kb = jax.random.split(key)
    x = jax.random.uniform(kx, (B, C, T, H, W), dtype=jnp.float32)  # non-negative (NMF)

    out = matrix_decomposition_forward(
        x, kb, dim='3D', S=S, R=R, steps=STEPS, inv_t=INV_T, eps=EPS)
    out = jax.block_until_ready(out)
    assert out.shape == (B, C, T, H, W)

    # correctness vs pure-JAX reference (same bases init as the wrapper)
    D, N = T // S, C * H * W
    xr = jnp.reshape(x, (B * S, D, N))
    bases0 = jax.random.uniform(kb, (B * S, D, R), dtype=jnp.float32)
    bases0 = bases0 / jnp.maximum(
        jnp.sqrt(jnp.sum(bases0 * bases0, axis=1, keepdims=True)), 1e-12)
    ref = jnp.reshape(
        _reference(xr, bases0, steps=STEPS, inv_t=INV_T, eps=EPS),
        (B, C, T, H, W))
    assert jnp.allclose(out, ref, rtol=5e-4, atol=5e-4), \
        f"max abs diff {jnp.max(jnp.abs(out - ref))}"

    print("KERNEL_OK")
</pallas_src>

<mosaic_0001>
module attributes {stable_mosaic.version = 11 : i64} {
  func.func @_md_nmf_kernel(%arg0: i32, %arg1: memref<1x8x256xf32, #tpu.memory_space<vmem>>, %arg2: memref<1x8x8xf32, #tpu.memory_space<vmem>>, %arg3: memref<1x8x256xf32, #tpu.memory_space<vmem>>) attributes {dimension_semantics = [#tpu.dimension_semantics<parallel>], iteration_bounds = array<i64: 2>, scalar_prefetch = 0 : i64, scratch_operands = 0 : i64, tpu.core_type = #tpu.core_type<tc>, window_params = [{transform_indices = @transform_0, window_bounds = array<i64: 1, 8, 256>}, {transform_indices = @transform_1, window_bounds = array<i64: 1, 8, 8>}, {transform_indices = @transform_2, window_bounds = array<i64: 1, 8, 256>}]} {
    %c0 = arith.constant 0 : index
    %c0_0 = arith.constant 0 : index
    %c0_1 = arith.constant 0 : index
    %0 = vector.load %arg1[%c0, %c0_0, %c0_1] : memref<1x8x256xf32, #tpu.memory_space<vmem>>, vector<1x8x256xf32>
    %c0_2 = arith.constant 0 : index
    %c0_3 = arith.constant 0 : index
    %c0_4 = arith.constant 0 : index
    %1 = vector.load %arg2[%c0_2, %c0_3, %c0_4] : memref<1x8x8xf32, #tpu.memory_space<vmem>>, vector<1x8x8xf32>
    "tpu.trace_start"() <{level = 10 : i32, message = "bdr,bdn->brn"}> : () -> ()
    %cst = arith.constant dense<0.000000e+00> : vector<1x8x256xf32>
    %2 = tpu.matmul %1, %0, %cst {dimension_numbers = #tpu.dot_dimension_numbers<[1], [1], [2], [2], [0, 0, 0, 2, 1, 2], [0], [0]>} : vector<1x8x8xf32>, vector<1x8x256xf32>, vector<1x8x256xf32> -> vector<1x8x256xf32>
    "tpu.trace_stop"() : () -> ()
    %cst_5 = arith.constant 1.000000e+00 : f32
    %3 = vector.broadcast %cst_5 : f32 to vector<1x8x256xf32>
    %4 = arith.mulf %3, %2 : vector<1x8x256xf32>
    %cst_6 = arith.constant dense<0xFF800000> : vector<1x256xf32>
    %5 = vector.multi_reduction <maximumf>, %4, %cst_6 [1] : vector<1x8x256xf32> to vector<1x256xf32>
    %6 = vector.shape_cast %5 : vector<1x256xf32> to vector<1x1x256xf32>
    %7 = vector.broadcast %6 : vector<1x1x256xf32> to vector<1x8x256xf32>
    %8 = arith.subf %4, %7 : vector<1x8x256xf32>
    %9 = math.exp %8 : vector<1x8x256xf32>
    %cst_7 = arith.constant dense<0.000000e+00> : vector<1x256xf32>
    %10 = vector.multi_reduction <add>, %9, %cst_7 [1] : vector<1x8x256xf32> to vector<1x256xf32>
    %11 = vector.shape_cast %10 : vector<1x256xf32> to vector<1x1x256xf32>
    %12 = tpu.reciprocal %11 {approx = true} : vector<1x1x256xf32> -> vector<1x1x256xf32>
    %13 = arith.mulf %11, %12 : vector<1x1x256xf32>
    %cst_8 = arith.constant 2.000000e+00 : f32
    %14 = vector.broadcast %cst_8 : f32 to vector<1x1x256xf32>
    %15 = arith.subf %14, %13 : vector<1x1x256xf32>
    %16 = arith.mulf %12, %15 : vector<1x1x256xf32>
    %17 = vector.broadcast %16 : vector<1x1x256xf32> to vector<1x8x256xf32>
    %18 = arith.mulf %9, %17 : vector<1x8x256xf32>
    "tpu.trace_start"() <{level = 10 : i32, message = "bdr,bdn->brn"}> : () -> ()
    %cst_9 = arith.constant dense<0.000000e+00> : vector<1x8x256xf32>
    %19 = tpu.matmul %1, %0, %cst_9 {dimension_numbers = #tpu.dot_dimension_numbers<[1], [1], [2], [2], [0, 0, 0, 2, 1, 2], [0], [0]>} : vector<1x8x8xf32>, vector<1x8x256xf32>, vector<1x8x256xf32> -> vector<1x8x256xf32>
    "tpu.trace_stop"() : () -> ()
    "tpu.trace_start"() <{level = 10 : i32, message = "bdr,bdk->brk"}> : () -> ()
    %cst_10 = arith.constant dense<0.000000e+00> : vector<1x8x8xf32>
    %20 = tpu.matmul %1, %1, %cst_10 {dimension_numbers = #tpu.dot_dimension_numbers<[1], [1], [2], [2], [0, 0, 0, 2, 1, 2], [0], [0]>} : vector<1x8x8xf32>, vector<1x8x8xf32>, vector<1x8x8xf32> -> vector<1x8x8xf32>
    "tpu.trace_stop"() : () -> ()
    "tpu.trace_start"() <{level = 10 : i32, message = "brk,bkn->brn"}> : () -> ()
    %cst_11 = arith.constant dense<0.000000e+00> : vector<1x8x256xf32>
    %21 = tpu.matmul %20, %18, %cst_11 {dimension_numbers = #tpu.dot_dimension_numbers<[2], [1], [1], [2], [0, 0, 0, 1, 1, 2], [0], [0]>} : vector<1x8x8xf32>, vector<1x8x256xf32>, vector<1x8x256xf32> -> vector<1x8x256xf32>
    "tpu.trace_stop"() : () -> ()
    %22 = arith.mulf %18, %19 : vector<1x8x256xf32>
    %cst_12 = arith.constant 9.99999997E-7 : f32
    %23 = vector.broadcast %cst_12 : f32 to vector<1x8x256xf32>
    %24 = arith.addf %21, %23 : vector<1x8x256xf32>
    %25 = tpu.reciprocal %24 {approx = true} : vector<1x8x256xf32> -> vector<1x8x256xf32>
    %26 = arith.mulf %24, %25 : vector<1x8x256xf32>
    %cst_13 = arith.constant 2.000000e+00 : f32
    %27 = vector.broadcast %cst_13 : f32 to vector<1x8x256xf32>
    %28 = arith.subf %27, %26 : vector<1x8x256xf32>
    %29 = arith.mulf %25, %28 : vector<1x8x256xf32>
    %30 = arith.mulf %22, %29 : vector<1x8x256xf32>
    "tpu.trace_start"() <{level = 10 : i32, message = "bdn,brn->bdr"}> : () -> ()
    %cst_14 = arith.constant dense<0.000000e+00> : vector<1x8x8xf32>
    %31 = tpu.matmul %0, %30, %cst_14 {dimension_numbers = #tpu.dot_dimension_numbers<[2], [2], [1], [1], [0, 0, 0, 1, 1, 1], [0], [0]>} : vector<1x8x256xf32>, vector<1x8x256xf32>, vector<1x8x8xf32> -> vector<1x8x8xf32>
    "tpu.trace_stop"() : () -> ()
    "tpu.trace_start"() <{level = 10 : i32, message = "brn,bkn->brk"}> : () -> ()
    %cst_15 = arith.constant dense<0.000000e+00> : vector<1x8x8xf32>
    %32 = tpu.matmul %30, %30, %cst_15 {dimension_numbers = #tpu.dot_dimension_numbers<[2], [2], [1], [1], [0, 0, 0, 1, 1, 1], [0], [0]>} : vector<1x8x256xf32>, vector<1x8x256xf32>, vector<1x8x8xf32> -> vector<1x8x8xf32>
    "tpu.trace_stop"() : () -> ()
    "tpu.trace_start"() <{level = 10 : i32, message = "bdr,brk->bdk"}> : () -> ()
    %cst_16 = arith.constant dense<0.000000e+00> : vector<1x8x8xf32>
    %33 = tpu.matmul %1, %32, %cst_16 {dimension_numbers = #tpu.dot_dimension_numbers<[2], [1], [1], [2], [0, 0, 0, 1, 1, 2], [0], [0]>} : vector<1x8x8xf32>, vector<1x8x8xf32>, vector<1x8x8xf32> -> vector<1x8x8xf32>
    "tpu.trace_stop"() : () -> ()
    %34 = arith.mulf %1, %31 : vector<1x8x8xf32>
    %cst_17 = arith.constant 9.99999997E-7 : f32
    %35 = vector.broadcast %cst_17 : f32 to vector<1x8x8xf32>
    %36 = arith.addf %33, %35 : vector<1x8x8xf32>
    %37 = tpu.reciprocal %36 {approx = true} : vector<1x8x8xf32> -> vector<1x8x8xf32>
    %38 = arith.mulf %36, %37 : vector<1x8x8xf32>
    %cst_18 = arith.constant 2.000000e+00 : f32
    %39 = vector.broadcast %cst_18 : f32 to vector<1x8x8xf32>
    %40 = arith.subf %39, %38 : vector<1x8x8xf32>
    %41 = arith.mulf %37, %40 : vector<1x8x8xf32>
    %42 = arith.mulf %34, %41 : vector<1x8x8xf32>
    "tpu.trace_start"() <{level = 10 : i32, message = "bdr,bdn->brn"}> : () -> ()
    %cst_19 = arith.constant dense<0.000000e+00> : vector<1x8x256xf32>
    %43 = tpu.matmul %42, %0, %cst_19 {dimension_numbers = #tpu.dot_dimension_numbers<[1], [1], [2], [2], [0, 0, 0, 2, 1, 2], [0], [0]>} : vector<1x8x8xf32>, vector<1x8x256xf32>, vector<1x8x256xf32> -> vector<1x8x256xf32>
    "tpu.trace_stop"() : () -> ()
    "tpu.trace_start"() <{level = 10 : i32, message = "bdr,bdk->brk"}> : () -> ()
    %cst_20 = arith.constant dense<0.000000e+00> : vector<1x8x8xf32>
    %44 = tpu.matmul %42, %42, %cst_20 {dimension_numbers = #tpu.dot_dimension_numbers<[1], [1], [2], [2], [0, 0, 0, 2, 1, 2], [0], [0]>} : vector<1x8x8xf32>, vector<1x8x8xf32>, vector<1x8x8xf32> -> vector<1x8x8xf32>
    "tpu.trace_stop"() : () -> ()
    "tpu.trace_start"() <{level = 10 : i32, message = "brk,bkn->brn"}> : () -> ()
    %cst_21 = arith.constant dense<0.000000e+00> : vector<1x8x256xf32>
    %45 = tpu.matmul %44, %30, %cst_21 {dimension_numbers = #tpu.dot_dimension_numbers<[2], [1], [1], [2], [0, 0, 0, 1, 1, 2], [0], [0]>} : vector<1x8x8xf32>, vector<1x8x256xf32>, vector<1x8x256xf32> -> vector<1x8x256xf32>
    "tpu.trace_stop"() : () -> ()
    %46 = arith.mulf %30, %43 : vector<1x8x256xf32>
    %cst_22 = arith.constant 9.99999997E-7 : f32
    %47 = vector.broadcast %cst_22 : f32 to vector<1x8x256xf32>
    %48 = arith.addf %45, %47 : vector<1x8x256xf32>
    %49 = tpu.reciprocal %48 {approx = true} : vector<1x8x256xf32> -> vector<1x8x256xf32>
    %50 = arith.mulf %48, %49 : vector<1x8x256xf32>
    %cst_23 = arith.constant 2.000000e+00 : f32
    %51 = vector.broadcast %cst_23 : f32 to vector<1x8x256xf32>
    %52 = arith.subf %51, %50 : vector<1x8x256xf32>
    %53 = arith.mulf %49, %52 : vector<1x8x256xf32>
    %54 = arith.mulf %46, %53 : vector<1x8x256xf32>
    "tpu.trace_start"() <{level = 10 : i32, message = "bdn,brn->bdr"}> : () -> ()
    %cst_24 = arith.constant dense<0.000000e+00> : vector<1x8x8xf32>
    %55 = tpu.matmul %0, %54, %cst_24 {dimension_numbers = #tpu.dot_dimension_numbers<[2], [2], [1], [1], [0, 0, 0, 1, 1, 1], [0], [0]>} : vector<1x8x256xf32>, vector<1x8x256xf32>, vector<1x8x8xf32> -> vector<1x8x8xf32>
    "tpu.trace_stop"() : () -> ()
    "tpu.trace_start"() <{level = 10 : i32, message = "brn,bkn->brk"}> : () -> ()
    %cst_25 = arith.constant dense<0.000000e+00> : vector<1x8x8xf32>
    %56 = tpu.matmul %54, %54, %cst_25 {dimension_numbers = #tpu.dot_dimension_numbers<[2], [2], [1], [1], [0, 0, 0, 1, 1, 1], [0], [0]>} : vector<1x8x256xf32>, vector<1x8x256xf32>, vector<1x8x8xf32> -> vector<1x8x8xf32>
    "tpu.trace_stop"() : () -> ()
    "tpu.trace_start"() <{level = 10 : i32, message = "bdr,brk->bdk"}> : () -> ()
    %cst_26 = arith.constant dense<0.000000e+00> : vector<1x8x8xf32>
    %57 = tpu.matmul %42, %56, %cst_26 {dimension_numbers = #tpu.dot_dimension_numbers<[2], [1], [1], [2], [0, 0, 0, 1, 1, 2], [0], [0]>} : vector<1x8x8xf32>, vector<1x8x8xf32>, vector<1x8x8xf32> -> vector<1x8x8xf32>
    "tpu.trace_stop"() : () -> ()
    %58 = arith.mulf %42, %55 : vector<1x8x8xf32>
    %cst_27 = arith.constant 9.99999997E-7 : f32
    %59 = vector.broadcast %cst_27 : f32 to vector<1x8x8xf32>
    %60 = arith.addf %57, %59 : vector<1x8x8xf32>
    %61 = tpu.reciprocal %60 {approx = true} : vector<1x8x8xf32> -> vector<1x8x8xf32>
    %62 = arith.mulf %60, %61 : vector<1x8x8xf32>
    %cst_28 = arith.constant 2.000000e+00 : f32
    %63 = vector.broadcast %cst_28 : f32 to vector<1x8x8xf32>
    %64 = arith.subf %63, %62 : vector<1x8x8xf32>
    %65 = arith.mulf %61, %64 : vector<1x8x8xf32>
    %66 = arith.mulf %58, %65 : vector<1x8x8xf32>
    "tpu.trace_start"() <{level = 10 : i32, message = "bdr,bdn->brn"}> : () -> ()
    %cst_29 = arith.constant dense<0.000000e+00> : vector<1x8x256xf32>
    %67 = tpu.matmul %66, %0, %cst_29 {dimension_numbers = #tpu.dot_dimension_numbers<[1], [1], [2], [2], [0, 0, 0, 2, 1, 2], [0], [0]>} : vector<1x8x8xf32>, vector<1x8x256xf32>, vector<1x8x256xf32> -> vector<1x8x256xf32>
    "tpu.trace_stop"() : () -> ()
    "tpu.trace_start"() <{level = 10 : i32, message = "bdr,bdk->brk"}> : () -> ()
    %cst_30 = arith.constant dense<0.000000e+00> : vector<1x8x8xf32>
    %68 = tpu.matmul %66, %66, %cst_30 {dimension_numbers = #tpu.dot_dimension_numbers<[1], [1], [2], [2], [0, 0, 0, 2, 1, 2], [0], [0]>} : vector<1x8x8xf32>, vector<1x8x8xf32>, vector<1x8x8xf32> -> vector<1x8x8xf32>
    "tpu.trace_stop"() : () -> ()
    "tpu.trace_start"() <{level = 10 : i32, message = "brk,bkn->brn"}> : () -> ()
    %cst_31 = arith.constant dense<0.000000e+00> : vector<1x8x256xf32>
    %69 = tpu.matmul %68, %54, %cst_31 {dimension_numbers = #tpu.dot_dimension_numbers<[2], [1], [1], [2], [0, 0, 0, 1, 1, 2], [0], [0]>} : vector<1x8x8xf32>, vector<1x8x256xf32>, vector<1x8x256xf32> -> vector<1x8x256xf32>
    "tpu.trace_stop"() : () -> ()
    %70 = arith.mulf %54, %67 : vector<1x8x256xf32>
    %cst_32 = arith.constant 9.99999997E-7 : f32
    %71 = vector.broadcast %cst_32 : f32 to vector<1x8x256xf32>
    %72 = arith.addf %69, %71 : vector<1x8x256xf32>
    %73 = tpu.reciprocal %72 {approx = true} : vector<1x8x256xf32> -> vector<1x8x256xf32>
    %74 = arith.mulf %72, %73 : vector<1x8x256xf32>
    %cst_33 = arith.constant 2.000000e+00 : f32
    %75 = vector.broadcast %cst_33 : f32 to vector<1x8x256xf32>
    %76 = arith.subf %75, %74 : vector<1x8x256xf32>
    %77 = arith.mulf %73, %76 : vector<1x8x256xf32>
    %78 = arith.mulf %70, %77 : vector<1x8x256xf32>
    "tpu.trace_start"() <{level = 10 : i32, message = "bdn,brn->bdr"}> : () -> ()
    %cst_34 = arith.constant dense<0.000000e+00> : vector<1x8x8xf32>
    %79 = tpu.matmul %0, %78, %cst_34 {dimension_numbers = #tpu.dot_dimension_numbers<[2], [2], [1], [1], [0, 0, 0, 1, 1, 1], [0], [0]>} : vector<1x8x256xf32>, vector<1x8x256xf32>, vector<1x8x8xf32> -> vector<1x8x8xf32>
    "tpu.trace_stop"() : () -> ()
    "tpu.trace_start"() <{level = 10 : i32, message = "brn,bkn->brk"}> : () -> ()
    %cst_35 = arith.constant dense<0.000000e+00> : vector<1x8x8xf32>
    %80 = tpu.matmul %78, %78, %cst_35 {dimension_numbers = #tpu.dot_dimension_numbers<[2], [2], [1], [1], [0, 0, 0, 1, 1, 1], [0], [0]>} : vector<1x8x256xf32>, vector<1x8x256xf32>, vector<1x8x8xf32> -> vector<1x8x8xf32>
    "tpu.trace_stop"() : () -> ()
    "tpu.trace_start"() <{level = 10 : i32, message = "bdr,brk->bdk"}> : () -> ()
    %cst_36 = arith.constant dense<0.000000e+00> : vector<1x8x8xf32>
    %81 = tpu.matmul %66, %80, %cst_36 {dimension_numbers = #tpu.dot_dimension_numbers<[2], [1], [1], [2], [0, 0, 0, 1, 1, 2], [0], [0]>} : vector<1x8x8xf32>, vector<1x8x8xf32>, vector<1x8x8xf32> -> vector<1x8x8xf32>
    "tpu.trace_stop"() : () -> ()
    %82 = arith.mulf %66, %79 : vector<1x8x8xf32>
    %cst_37 = arith.constant 9.99999997E-7 : f32
    %83 = vector.broadcast %cst_37 : f32 to vector<1x8x8xf32>
    %84 = arith.addf %81, %83 : vector<1x8x8xf32>
    %85 = tpu.reciprocal %84 {approx = true} : vector<1x8x8xf32> -> vector<1x8x8xf32>
    %86 = arith.mulf %84, %85 : vector<1x8x8xf32>
    %cst_38 = arith.constant 2.000000e+00 : f32
    %87 = vector.broadcast %cst_38 : f32 to vector<1x8x8xf32>
    %88 = arith.subf %87, %86 : vector<1x8x8xf32>
    %89 = arith.mulf %85, %88 : vector<1x8x8xf32>
    %90 = arith.mulf %82, %89 : vector<1x8x8xf32>
    "tpu.trace_start"() <{level = 10 : i32, message = "bdr,bdn->brn"}> : () -> ()
    %cst_39 = arith.constant dense<0.000000e+00> : vector<1x8x256xf32>
    %91 = tpu.matmul %90, %0, %cst_39 {dimension_numbers = #tpu.dot_dimension_numbers<[1], [1], [2], [2], [0, 0, 0, 2, 1, 2], [0], [0]>} : vector<1x8x8xf32>, vector<1x8x256xf32>, vector<1x8x256xf32> -> vector<1x8x256xf32>
    "tpu.trace_stop"() : () -> ()
    "tpu.trace_start"() <{level = 10 : i32, message = "bdr,bdk->brk"}> : () -> ()
    %cst_40 = arith.constant dense<0.000000e+00> : vector<1x8x8xf32>
    %92 = tpu.matmul %90, %90, %cst_40 {dimension_numbers = #tpu.dot_dimension_numbers<[1], [1], [2], [2], [0, 0, 0, 2, 1, 2], [0], [0]>} : vector<1x8x8xf32>, vector<1x8x8xf32>, vector<1x8x8xf32> -> vector<1x8x8xf32>
    "tpu.trace_stop"() : () -> ()
    "tpu.trace_start"() <{level = 10 : i32, message = "brk,bkn->brn"}> : () -> ()
    %cst_41 = arith.constant dense<0.000000e+00> : vector<1x8x256xf32>
    %93 = tpu.matmul %92, %78, %cst_41 {dimension_numbers = #tpu.dot_dimension_numbers<[2], [1], [1], [2], [0, 0, 0, 1, 1, 2], [0], [0]>} : vector<1x8x8xf32>, vector<1x8x256xf32>, vector<1x8x256xf32> -> vector<1x8x256xf32>
    "tpu.trace_stop"() : () -> ()
    %94 = arith.mulf %78, %91 : vector<1x8x256xf32>
    %cst_42 = arith.constant 9.99999997E-7 : f32
    %95 = vector.broadcast %cst_42 : f32 to vector<1x8x256xf32>
    %96 = arith.addf %93, %95 : vector<1x8x256xf32>
    %97 = tpu.reciprocal %96 {approx = true} : vector<1x8x256xf32> -> vector<1x8x256xf32>
    %98 = arith.mulf %96, %97 : vector<1x8x256xf32>
    %cst_43 = arith.constant 2.000000e+00 : f32
    %99 = vector.broadcast %cst_43 : f32 to vector<1x8x256xf32>
    %100 = arith.subf %99, %98 : vector<1x8x256xf32>
    %101 = arith.mulf %97, %100 : vector<1x8x256xf32>
    %102 = arith.mulf %94, %101 : vector<1x8x256xf32>
    "tpu.trace_start"() <{level = 10 : i32, message = "bdn,brn->bdr"}> : () -> ()
    %cst_44 = arith.constant dense<0.000000e+00> : vector<1x8x8xf32>
    %103 = tpu.matmul %0, %102, %cst_44 {dimension_numbers = #tpu.dot_dimension_numbers<[2], [2], [1], [1], [0, 0, 0, 1, 1, 1], [0], [0]>} : vector<1x8x256xf32>, vector<1x8x256xf32>, vector<1x8x8xf32> -> vector<1x8x8xf32>
    "tpu.trace_stop"() : () -> ()
    "tpu.trace_start"() <{level = 10 : i32, message = "brn,bkn->brk"}> : () -> ()
    %cst_45 = arith.constant dense<0.000000e+00> : vector<1x8x8xf32>
    %104 = tpu.matmul %102, %102, %cst_45 {dimension_numbers = #tpu.dot_dimension_numbers<[2], [2], [1], [1], [0, 0, 0, 1, 1, 1], [0], [0]>} : vector<1x8x256xf32>, vector<1x8x256xf32>, vector<1x8x8xf32> -> vector<1x8x8xf32>
    "tpu.trace_stop"() : () -> ()
    "tpu.trace_start"() <{level = 10 : i32, message = "bdr,brk->bdk"}> : () -> ()
    %cst_46 = arith.constant dense<0.000000e+00> : vector<1x8x8xf32>
    %105 = tpu.matmul %90, %104, %cst_46 {dimension_numbers = #tpu.dot_dimension_numbers<[2], [1], [1], [2], [0, 0, 0, 1, 1, 2], [0], [0]>} : vector<1x8x8xf32>, vector<1x8x8xf32>, vector<1x8x8xf32> -> vector<1x8x8xf32>
    "tpu.trace_stop"() : () -> ()
    %106 = arith.mulf %90, %103 : vector<1x8x8xf32>
    %cst_47 = arith.constant 9.99999997E-7 : f32
    %107 = vector.broadcast %cst_47 : f32 to vector<1x8x8xf32>
    %108 = arith.addf %105, %107 : vector<1x8x8xf32>
    %109 = tpu.reciprocal %108 {approx = true} : vector<1x8x8xf32> -> vector<1x8x8xf32>
    %110 = arith.mulf %108, %109 : vector<1x8x8xf32>
    %cst_48 = arith.constant 2.000000e+00 : f32
    %111 = vector.broadcast %cst_48 : f32 to vector<1x8x8xf32>
    %112 = arith.subf %111, %110 : vector<1x8x8xf32>
    %113 = arith.mulf %109, %112 : vector<1x8x8xf32>
    %114 = arith.mulf %106, %113 : vector<1x8x8xf32>
    "tpu.trace_start"() <{level = 10 : i32, message = "bdr,bdn->brn"}> : () -> ()
    %cst_49 = arith.constant dense<0.000000e+00> : vector<1x8x256xf32>
    %115 = tpu.matmul %114, %0, %cst_49 {dimension_numbers = #tpu.dot_dimension_numbers<[1], [1], [2], [2], [0, 0, 0, 2, 1, 2], [0], [0]>} : vector<1x8x8xf32>, vector<1x8x256xf32>, vector<1x8x256xf32> -> vector<1x8x256xf32>
    "tpu.trace_stop"() : () -> ()
    "tpu.trace_start"() <{level = 10 : i32, message = "bdr,bdk->brk"}> : () -> ()
    %cst_50 = arith.constant dense<0.000000e+00> : vector<1x8x8xf32>
    %116 = tpu.matmul %114, %114, %cst_50 {dimension_numbers = #tpu.dot_dimension_numbers<[1], [1], [2], [2], [0, 0, 0, 2, 1, 2], [0], [0]>} : vector<1x8x8xf32>, vector<1x8x8xf32>, vector<1x8x8xf32> -> vector<1x8x8xf32>
    "tpu.trace_stop"() : () -> ()
    "tpu.trace_start"() <{level = 10 : i32, message = "brk,bkn->brn"}> : () -> ()
    %cst_51 = arith.constant dense<0.000000e+00> : vector<1x8x256xf32>
    %117 = tpu.matmul %116, %102, %cst_51 {dimension_numbers = #tpu.dot_dimension_numbers<[2], [1], [1], [2], [0, 0, 0, 1, 1, 2], [0], [0]>} : vector<1x8x8xf32>, vector<1x8x256xf32>, vector<1x8x256xf32> -> vector<1x8x256xf32>
    "tpu.trace_stop"() : () -> ()
    %118 = arith.mulf %102, %115 : vector<1x8x256xf32>
    %cst_52 = arith.constant 9.99999997E-7 : f32
    %119 = vector.broadcast %cst_52 : f32 to vector<1x8x256xf32>
    %120 = arith.addf %117, %119 : vector<1x8x256xf32>
    %121 = tpu.reciprocal %120 {approx = true} : vector<1x8x256xf32> -> vector<1x8x256xf32>
    %122 = arith.mulf %120, %121 : vector<1x8x256xf32>
    %cst_53 = arith.constant 2.000000e+00 : f32
    %123 = vector.broadcast %cst_53 : f32 to vector<1x8x256xf32>
    %124 = arith.subf %123, %122 : vector<1x8x256xf32>
    %125 = arith.mulf %121, %124 : vector<1x8x256xf32>
    %126 = arith.mulf %118, %125 : vector<1x8x256xf32>
    "tpu.trace_start"() <{level = 10 : i32, message = "bdr,brn->bdn"}> : () -> ()
    %cst_54 = arith.constant dense<0.000000e+00> : vector<1x8x256xf32>
    %127 = tpu.matmul %114, %126, %cst_54 {dimension_numbers = #tpu.dot_dimension_numbers<[2], [1], [1], [2], [0, 0, 0, 1, 1, 2], [0], [0]>} : vector<1x8x8xf32>, vector<1x8x256xf32>, vector<1x8x256xf32> -> vector<1x8x256xf32>
    "tpu.trace_stop"() : () -> ()
    %c0_55 = arith.constant 0 : index
    %c0_56 = arith.constant 0 : index
    %c0_57 = arith.constant 0 : index
    %128 = vector.load %arg3[%c0_55, %c0_56, %c0_57] : memref<1x8x256xf32, #tpu.memory_space<vmem>>, vector<1x8x256xf32>
    tpu.vector_store %arg3[%c0_55, %c0_56, %c0_57], %127 {strides = array<i32>} : memref<1x8x256xf32, #tpu.memory_space<vmem>>, vector<1x8x256xf32>,
    return
  }
  func.func @transform_0(%arg0: i32) -> (i32, i32, i32) {
    %c0_i32 = arith.constant 0 : i32
    %c0_i32_0 = arith.constant 0 : i32
    %c0_i32_1 = arith.constant 0 : i32
    return %arg0, %c0_i32, %c0_i32_0 : i32, i32, i32
  }
  func.func @transform_1(%arg0: i32) -> (i32, i32, i32) {
    %c0_i32 = arith.constant 0 : i32
    %c0_i32_0 = arith.constant 0 : i32
    %c0_i32_1 = arith.constant 0 : i32
    return %arg0, %c0_i32, %c0_i32_0 : i32, i32, i32
  }
  func.func @transform_2(%arg0: i32) -> (i32, i32, i32) {
    %c0_i32 = arith.constant 0 : i32
    %c0_i32_0 = arith.constant 0 : i32
    %c0_i32_1 = arith.constant 0 : i32
    return %arg0, %c0_i32, %c0_i32_0 : i32, i32, i32
  }
}

</mosaic_0001>

<llo_original>
// kernel: tpu_custom_call.1
$region0: #{tpu_custom_call.1}
  #allocation0 [shape = 'u32[]', space=smem, size = 0x4, offset = 0x4, fixed_abs, tag = 'smem constant byte address 0x4 - core index']
  #allocation1 [shape = 'u32[72,128]{1,0:T(1,128)}', space=vmem, size = 0x9000, scoped, tag = 'internal scratch']
  %s0 = inlined_call_operand.hbm [shape: f32[2,8,256], index: 0, kind: input, shape index: {}]
  %s1 = inlined_call_operand.hbm [shape: f32[2,8,8], index: 1, kind: input, shape index: {}]
  %s2 = inlined_call_operand.hbm [shape: f32[2,8,256], index: 2, kind: output, shape index: {}]
  %s3 = sld [smem:[#allocation0]]
  $region49: #{tpu_custom_call.1} parent=0
    _
  %s5 = ssub.s32 1, %s3
  %s6 = scalar_select 0, %s5, %s3
  $region1: #{tpu_custom_call.1} parent=0
    #allocation2 [shape = 'u8[16384]{0}', space=vmem, size = 0x4000, scoped, tag = 'input window, operand 0']
    #allocation3 [shape = 's32[2]{0}', space=sflag, size = 0x8, scoped, tag = 'scoped memory for tpu_custom_call.1']
    #allocation4 [shape = 's32[2]{0}', space=sflag, size = 0x8, scoped, tag = 'scoped memory for tpu_custom_call.1']
    #allocation5 [shape = 'u8[8192]{0}', space=vmem, size = 0x2000, scoped, tag = 'input window, operand 1']
    #allocation6 [shape = 's32[2]{0}', space=sflag, size = 0x8, scoped, tag = 'scoped memory for tpu_custom_call.1']
    #allocation7 [shape = 'u8[16384]{0}', space=vmem, size = 0x4000, scoped, tag = 'output window, operand 0']
    %7 = vsyncpa [#allocation3], 0
    %s8 = scalar_lea.sflag [#allocation3], 1
    %9 = vsyncpa %s8, 0
    %10 = vsyncpa [#allocation6], 0
    %s11 = scalar_lea.sflag [#allocation6], 1
    %12 = vsyncpa %s11, 0
    %13 = vsyncpa [#allocation4], 0
    %s14 = scalar_lea.sflag [#allocation4], 1
    %15 = vsyncpa %s14, 0
    loop: start=0, step=1, limit=4
    $region2: #{tpu_custom_call.1} parent=1 // loop_pre_header
      _
    $region3: #{tpu_custom_call.1} parent=1 // loop_header
      %s17 = sphi 0, %s21
      %p18 = scmp.ge.s32.totalorder %s17, 4
      %s27 = sphi 0, %s29
      %s30 = sphi 0, %s27
      %s31 = sphi 0, %s30
      %s47 = sphi 0, %s31
      %s53 = sphi 0, %s55
      %s56 = sphi 0, %s53
      %s57 = sphi 0, %s56
      %s73 = sphi 0, %s57
      %s79 = sphi 0, %s81
      %s82 = sphi 0, %s79
      %s83 = sphi 0, %s82
      %s99 = sphi 0, %s83
    $region4: #{tpu_custom_call.1} parent=1 // loop_header_branch
      %20 = sbr.rel (%p18) target = $region8
    $region5: #{tpu_custom_call.1} parent=1 // loop_body
      %s22 = ssub.s32 %s17, 1
      %s23 = ssub.s32 %s17, 2
      %s24 = sadd.s32 %s17, 1
      %s25 = ssub.s32 %s17, %s24
      %p26 = scmp.eq.s32.totalorder %s25, 0
      %s28 = sadd.s32 %s27, 1
      %s29 = scalar_select %p26, %s27, %s28
      %p32 = pneg %p26
      %p33 = scmp.eq.s32.totalorder %s17, 1
      %p34 = por %p32, %p33
      %p35 = scmp.ne.s32.totalorder %s27, %s30
      %p36 = scmp.eq.s32.totalorder %s17, 0
      %p37 = por %p35, %p36
      %p38 = scmp.ne.s32.totalorder %s27, %s30
      %p39 = scmp.eq.s32.totalorder %s22, 1
      %p40 = por %p38, %p39
      %p41 = scmp.ne.s32.totalorder %s30, %s31
      %p42 = scmp.eq.s32.totalorder %s22, 0
      %p43 = por %p41, %p42
      %p44 = scmp.ne.s32.totalorder %s30, %s31
      %p45 = scmp.eq.s32.totalorder %s23, 1
      %p46 = por %p44, %p45
      %p48 = scmp.ne.s32.totalorder %s31, %s47
      %p49 = scmp.eq.s32.totalorder %s23, 0
      %p50 = por %p48, %p49
      %s51 = ssub.s32 %s17, %s24
      %p52 = scmp.eq.s32.totalorder %s51, 0
      %s54 = sadd.s32 %s53, 1
      %s55 = scalar_select %p52, %s53, %s54
      %p58 = pneg %p52
      %p59 = scmp.eq.s32.totalorder %s17, 1
      %p60 = por %p58, %p59
      %p61 = scmp.ne.s32.totalorder %s53, %s56
      %p62 = scmp.eq.s32.totalorder %s17, 0
      %p63 = por %p61, %p62
      %p64 = scmp.ne.s32.totalorder %s53, %s56
      %p65 = scmp.eq.s32.totalorder %s22, 1
      %p66 = por %p64, %p65
      %p67 = scmp.ne.s32.totalorder %s56, %s57
      %p68 = scmp.eq.s32.totalorder %s22, 0
      %p69 = por %p67, %p68
      %p70 = scmp.ne.s32.totalorder %s56, %s57
      %p71 = scmp.eq.s32.totalorder %s23, 1
      %p72 = por %p70, %p71
      %p74 = scmp.ne.s32.totalorder %s57, %s73
      %p75 = scmp.eq.s32.totalorder %s23, 0
      %p76 = por %p74, %p75
      %s77 = ssub.s32 %s17, %s24
      %p78 = scmp.eq.s32.totalorder %s77, 0
      %s80 = sadd.s32 %s79, 1
      %s81 = scalar_select %p78, %s79, %s80
      %p84 = pneg %p78
      %p85 = scmp.eq.s32.totalorder %s17, 1
      %p86 = por %p84, %p85
      %p87 = scmp.ne.s32.totalorder %s79, %s82
      %p88 = scmp.eq.s32.totalorder %s17, 0
      %p89 = por %p87, %p88
      %p90 = scmp.ne.s32.totalorder %s79, %s82
      %p91 = scmp.eq.s32.totalorder %s22, 1
      %p92 = por %p90, %p91
      %p93 = scmp.ne.s32.totalorder %s82, %s83
      %p94 = scmp.eq.s32.totalorder %s22, 0
      %p95 = por %p93, %p94
      %p96 = scmp.ne.s32.totalorder %s82, %s83
      %p97 = scmp.eq.s32.totalorder %s23, 1
      %p98 = por %p96, %p97
      %p100 = scmp.ne.s32.totalorder %s83, %s99
      %p101 = scmp.eq.s32.totalorder %s23, 0
      %p102 = por %p100, %p101
      %p103 = scmp.le.s32.totalorder 1, %s17
      %p104 = scmp.lt.s32.totalorder %s17, 3
      %p105 = pnand %p103, %p104
      %p106 = pneg %p105
      // Predicated region
      $region9: #{tpu_custom_call.1} parent=5 // pred_check
        _
      $region10: #{tpu_custom_call.1} parent=5 // pred_check_branch
        %108 = sbr.rel (%p105) target = $region12
      $region11: #{tpu_custom_call.1} parent=5 // pred_region
        %s109 = ssub.s32 %s17, 1
      $region12: #{tpu_custom_call.1} parent=5 // pred_fallthru
        _
      %p110 = scmp.lt.s32.totalorder %s17, 2
      // Predicated region
      $region13: #{tpu_custom_call.1} parent=5 // pred_check
        %p111 = pneg %p110
      $region14: #{tpu_custom_call.1} parent=5 // pred_check_branch
        %113 = sbr.rel (%p111) target = $region16
      $region15: #{tpu_custom_call.1} parent=5 // pred_region
        // Predicated region
        $region17: #{tpu_custom_call.1} parent=15 // pred_check
          %p114 = pneg %p37
        $region18: #{tpu_custom_call.1} parent=15 // pred_check_branch
          %116 = sbr.rel (%p114) target = $region20
        $region19: #{tpu_custom_call.1} parent=15 // pred_region
          %s117 = sand.u32 %s27, 1
          %s118 = scalar_lea.sflag [#allocation3], %s117
          %s119 = sand.u32 %s27, 1
          %s120 = smul.addr %s119, 16
          %s121 = scalar_lea.vmem [#allocation2], %s120
          %123 = vsyncadd %s118, 0
          %s124 = smul.addr %s17, 2
          %s125 = smul.addr %s124, 8
          %s126 = scalar_lea.hbm %s0, %s125
          %s128 = sshll.u32 %s126, 4
          %s129 = int_to_ptr.hbm [resolvable:$true] %s128
          %s130 = sshll.u32 %s121, 4
          %s131 = int_to_ptr.vmem [resolvable:$true] %s130
          %133 = dma.hbm_to_vmem [thread:$0]  %s129, 256, %s131, %s118
        $region20: #{tpu_custom_call.1} parent=15 // pred_fallthru
          _
        // Predicated region
        $region21: #{tpu_custom_call.1} parent=15 // pred_check
          %p134 = pneg %p63
        $region22: #{tpu_custom_call.1} parent=15 // pred_check_branch
          %136 = sbr.rel (%p134) target = $region24
        $region23: #{tpu_custom_call.1} parent=15 // pred_region
          %s137 = sand.u32 %s53, 1
          %s138 = scalar_lea.sflag [#allocation6], %s137
          %s139 = sand.u32 %s53, 1
          %s140 = smul.addr %s139, 8
          %s141 = scalar_lea.vmem [#allocation5], %s140
          %143 = vsyncadd %s138, 0
          %s144 = smul.addr %s17, 8
          %s145 = scalar_lea.hbm %s1, %s144
          %s147 = sshll.u32 %s145, 4
          %s148 = int_to_ptr.hbm [resolvable:$true] %s147
          %s149 = sshll.u32 %s141, 4
          %s150 = int_to_ptr.vmem [resolvable:$true] %s149
          %152 = dma.hbm_to_vmem [thread:$0]  %s148, 128, %s150, %s138
        $region24: #{tpu_custom_call.1} parent=15 // pred_fallthru
          _
      $region16: #{tpu_custom_call.1} parent=5 // pred_fallthru
        _
      %p153 = scmp.le.s32.totalorder 1, %s17
      %p154 = scmp.lt.s32.totalorder %s17, 3
      %p155 = pnand %p153, %p154
      %p156 = pneg %p155
      // Predicated region
      $region25: #{tpu_custom_call.1} parent=5 // pred_check
        _
      $region26: #{tpu_custom_call.1} parent=5 // pred_check_branch
        %158 = sbr.rel (%p155) target = $region28
      $region27: #{tpu_custom_call.1} parent=5 // pred_region
        %s159 = ssub.s32 %s17, 1
        %s160 = sand.u32 %s30, 1
        %s161 = scalar_lea.sflag [#allocation3], %s160
        %s162 = sand.u32 %s30, 1
        %s163 = smul.addr %s162, 16
        %s164 = scalar_lea.vmem [#allocation2], %s163
        // Predicated region
        $region29: #{tpu_custom_call.1} parent=27 // pred_check
          %p165 = pneg %p43
        $region30: #{tpu_custom_call.1} parent=27 // pred_check_branch
          %167 = sbr.rel (%p165) target = $region32
        $region31: #{tpu_custom_call.1} parent=27 // pred_region
          %169 = dma.done %s161, 256
        $region32: #{tpu_custom_call.1} parent=27 // pred_fallthru
          _
        %s170 = sand.u32 %s56, 1
        %s171 = scalar_lea.sflag [#allocation6], %s170
        %s172 = sand.u32 %s56, 1
        %s173 = smul.addr %s172, 8
        %s174 = scalar_lea.vmem [#allocation5], %s173
        // Predicated region
        $region33: #{tpu_custom_call.1} parent=27 // pred_check
          %p175 = pneg %p69
        $region34: #{tpu_custom_call.1} parent=27 // pred_check_branch
          %177 = sbr.rel (%p175) target = $region36
        $region35: #{tpu_custom_call.1} parent=27 // pred_region
          %179 = dma.done %s171, 128
        $region36: #{tpu_custom_call.1} parent=27 // pred_fallthru
          _
        %s180 = sand.u32 %s30, 1
        %s181 = scalar_lea.sflag [#allocation3], %s180
        %s182 = sand.u32 %s30, 1
        %s183 = smul.addr %s182, 16
        %s184 = scalar_lea.vmem [#allocation2], %s183
        %p185 = pneg %p43
        %p186 = pneg %p40
        %s187 = sand.u32 %s56, 1
        %s188 = scalar_lea.sflag [#allocation6], %s187
        %s189 = sand.u32 %s56, 1
        %s190 = smul.addr %s189, 8
        %s191 = scalar_lea.vmem [#allocation5], %s190
        %p192 = pneg %p69
        %p193 = pneg %p66
        %p194 = pneg %p95
        %p195 = pneg %p92
        %s196 = sand.u32 %s82, 1
        %s197 = scalar_lea.sflag [#allocation4], %s196
        %s198 = sand.u32 %s82, 1
        %s199 = smul.addr %s198, 16
        %s200 = scalar_lea.vmem [#allocation7], %s199
        %v201 = vld [vmem:[%s164] sm:$0xff]
        %v202 = vld [vmem:[%s164 + $0x8] sm:$0xff]
        %v203 = vld [vmem:[%s174] sm:$0xff]
        %204 = vxpose.xlu0.b32.start [1/16] %v203, 128
        %205 = vxpose.xlu0.b32.cont [2/16] 0.0, 128
        %206 = vxpose.xlu0.b32.cont [3/16] 0.0, 128
        %207 = vxpose.xlu0.b32.cont [4/16] 0.0, 128
        %208 = vxpose.xlu0.b32.cont [5/16] 0.0, 128
        %209 = vxpose.xlu0.b32.cont [6/16] 0.0, 128
        %210 = vxpose.xlu0.b32.cont [7/16] 0.0, 128
        %211 = vxpose.xlu0.b32.cont [8/16] 0.0, 128
        %212 = vxpose.xlu0.b32.cont [9/16] 0.0, 128
        %213 = vxpose.xlu0.b32.cont [10/16] 0.0, 128
        %214 = vxpose.xlu0.b32.cont [11/16] 0.0, 128
        %215 = vxpose.xlu0.b32.cont [12/16] 0.0, 128
        %216 = vxpose.xlu0.b32.cont [13/16] 0.0, 128
        %217 = vxpose.xlu0.b32.cont [14/16] 0.0, 128
        %218 = vxpose.xlu0.b32.cont [15/16] 0.0, 128
        %219 = vxpose.xlu0.b32.end [16/16] 0.0, 128
        %v220 = vpop.trf.xlu0
        %v221 = vpop.trf.xlu0
        %v222 = vpop.trf.xlu0
        %v223 = vpop.trf.xlu0
        %v224 = vpop.trf.xlu0
        %v225 = vpop.trf.xlu0
        %v226 = vpop.trf.xlu0
        %v227 = vpop.trf.xlu0
        %v228 = vpop.trf.xlu0
        %v229 = vpop.trf.xlu0
        %v230 = vpop.trf.xlu0
        %v231 = vpop.trf.xlu0
        %v232 = vpop.trf.xlu0
        %v233 = vpop.trf.xlu0
        %v234 = vpop.trf.xlu0
        %v235 = vpop.trf.xlu0
        %vm236 = vcmask 64512
        %v238 = vsel %vm236, %v220, 0
        %240 = vmatpush.msra.mxu0 0.0
        %241 = vmatpush.msra.mxu0 0.0
        %242 = vmatpush.msra.mxu0 0.0
        %243 = vmatpush.msra.mxu0 0.0
        %244 = vmatpush.msra.mxu0 0.0
        %245 = vmatpush.msra.mxu0 0.0
        %246 = vmatpush.msra.mxu0 0.0
        %247 = vmatpush.msra.mxu0 0.0
        %248 = vmatpush.msra.mxu0 0.0
        %249 = vmatpush.msra.mxu0 0.0
        %250 = vmatpush.msra.mxu0 0.0
        %251 = vmatpush.msra.mxu0 0.0
        %252 = vmatpush.msra.mxu0 0.0
        %253 = vmatpush.msra.mxu0 0.0
        %254 = vmatpush.msra.mxu0 0.0
        %255 = vmatpush.msra.mxu0 %v201
        %256 = vmatmul.f32.gmra.mxu0 %v238
        %v257 = vpop.f32.mrf.mxu0
        %v258 = vadd.f32 0.0, %v257
        %259 = vdwg.mxu0
        %260 = vmatpush.msra.mxu0 0.0
        %261 = vmatpush.msra.mxu0 0.0
        %262 = vmatpush.msra.mxu0 0.0
        %263 = vmatpush.msra.mxu0 0.0
        %264 = vmatpush.msra.mxu0 0.0
        %265 = vmatpush.msra.mxu0 0.0
        %266 = vmatpush.msra.mxu0 0.0
        %267 = vmatpush.msra.mxu0 0.0
        %268 = vmatpush.msra.mxu0 0.0
        %269 = vmatpush.msra.mxu0 0.0
        %270 = vmatpush.msra.mxu0 0.0
        %271 = vmatpush.msra.mxu0 0.0
        %272 = vmatpush.msra.mxu0 0.0
        %273 = vmatpush.msra.mxu0 0.0
        %274 = vmatpush.msra.mxu0 0.0
        %275 = vmatpush.msra.mxu0 %v202
        %276 = vmatmul.f32.gmra.mxu0 %v238
        %v277 = vpop.f32.mrf.mxu0
        %v278 = vadd.f32 0.0, %v277
        %279 = vdwg.mxu0
        %v280 = vrot.slane %v258, 4
        %v281 = vmax.f32 %v258, %v280
        %v282 = vrot.slane %v281, 2
        %v283 = vmax.f32 %v281, %v282
        %v284 = vrot.slane %v283, 1
        %v285 = vmax.f32 %v283, %v284
        %v286 = vrot.slane %v278, 4
        %v287 = vmax.f32 %v278, %v286
        %v288 = vrot.slane %v287, 2
        %v289 = vmax.f32 %v287, %v288
        %v290 = vrot.slane %v289, 1
        %v291 = vmax.f32 %v289, %v290
        %v292 = vsub.f32 %v258, %v285
        %v293 = vsub.f32 %v278, %v291
        %v294 = vmul.f32 %v292, 1.442695
        %v295 = vpow.pop %v294
        %v296 = vmul.f32 %v293, 1.442695
        %v297 = vpow.pop %v296
        %v298 = vrot.slane %v295, 4
        %v299 = vadd.f32 %v295, %v298
        %v300 = vrot.slane %v299, 2
        %v301 = vadd.f32 %v299, %v300
        %v302 = vrot.slane %v301, 1
        %v303 = vadd.f32 %v301, %v302
        %v304 = vrot.slane %v297, 4
        %v305 = vadd.f32 %v297, %v304
        %v306 = vrot.slane %v305, 2
        %v307 = vadd.f32 %v305, %v306
        %v308 = vrot.slane %v307, 1
        %v309 = vadd.f32 %v307, %v308
        %v310 = vrcp.pop %v303
        %v311 = vrcp.pop %v309
        %v312 = vmul.f32 %v303, %v310
        %v313 = vmul.f32 %v309, %v311
        %v314 = vsub.f32 2.0, %v312
        %v315 = vsub.f32 2.0, %v313
        %v316 = vmul.f32 %v310, %v314
        %v317 = vmul.f32 %v311, %v315
        %v318 = vmul.f32 %v295, %v316
        %v319 = vmul.f32 %v297, %v317
        %320 = vmatpush.msra.mxu0 0.0
        %321 = vmatpush.msra.mxu0 0.0
        %322 = vmatpush.msra.mxu0 0.0
        %323 = vmatpush.msra.mxu0 0.0
        %324 = vmatpush.msra.mxu0 0.0
        %325 = vmatpush.msra.mxu0 0.0
        %326 = vmatpush.msra.mxu0 0.0
        %327 = vmatpush.msra.mxu0 0.0
        %328 = vmatpush.msra.mxu0 0.0
        %329 = vmatpush.msra.mxu0 0.0
        %330 = vmatpush.msra.mxu0 0.0
        %331 = vmatpush.msra.mxu0 0.0
        %332 = vmatpush.msra.mxu0 0.0
        %333 = vmatpush.msra.mxu0 0.0
        %334 = vmatpush.msra.mxu0 0.0
        %335 = vmatpush.msra.mxu0 %v203
        %336 = vmatmul.f32.gmra.mxu0 %v238
        %v337 = vpop.f32.mrf.mxu0
        %v338 = vadd.f32 0.0, %v337
        %339 = vdwg.mxu0
        %v340 = vmul.f32 %v318, %v258
        %v341 = vmul.f32 %v319, %v278
        %v343 = vsel %vm236, %v338, 0
        %345 = vmatpush.msra.mxu0 0.0
        %346 = vmatpush.msra.mxu0 0.0
        %347 = vmatpush.msra.mxu0 0.0
        %348 = vmatpush.msra.mxu0 0.0
        %349 = vmatpush.msra.mxu0 0.0
        %350 = vmatpush.msra.mxu0 0.0
        %351 = vmatpush.msra.mxu0 0.0
        %352 = vmatpush.msra.mxu0 0.0
        %353 = vmatpush.msra.mxu0 0.0
        %354 = vmatpush.msra.mxu0 0.0
        %355 = vmatpush.msra.mxu0 0.0
        %356 = vmatpush.msra.mxu0 0.0
        %357 = vmatpush.msra.mxu0 0.0
        %358 = vmatpush.msra.mxu0 0.0
        %359 = vmatpush.msra.mxu0 0.0
        %360 = vmatpush.msra.mxu0 %v318
        %361 = vmatmul.f32.gmra.mxu0 %v343
        %v362 = vpop.f32.mrf.mxu0
        %v363 = vadd.f32 1e-06, %v362
        %364 = vdwg.mxu0
        %365 = vmatpush.msra.mxu0 0.0
        %366 = vmatpush.msra.mxu0 0.0
        %367 = vmatpush.msra.mxu0 0.0
        %368 = vmatpush.msra.mxu0 0.0
        %369 = vmatpush.msra.mxu0 0.0
        %370 = vmatpush.msra.mxu0 0.0
        %371 = vmatpush.msra.mxu0 0.0
        %372 = vmatpush.msra.mxu0 0.0
        %373 = vmatpush.msra.mxu0 0.0
        %374 = vmatpush.msra.mxu0 0.0
        %375 = vmatpush.msra.mxu0 0.0
        %376 = vmatpush.msra.mxu0 0.0
        %377 = vmatpush.msra.mxu0 0.0
        %378 = vmatpush.msra.mxu0 0.0
        %379 = vmatpush.msra.mxu0 0.0
        %380 = vmatpush.msra.mxu0 %v319
        %381 = vmatmul.f32.gmra.mxu0 %v343
        %v382 = vpop.f32.mrf.mxu0
        %v383 = vadd.f32 1e-06, %v382
        %384 = vdwg.mxu0
        %v385 = vrcp.pop %v363
        %v386 = vrcp.pop %v383
        %v387 = vmul.f32 %v363, %v385
        %v388 = vmul.f32 %v383, %v386
        %v389 = vsub.f32 2.0, %v387
        %v390 = vsub.f32 2.0, %v388
        %v391 = vmul.f32 %v385, %v389
        %v392 = vmul.f32 %v386, %v390
        %v393 = vmul.f32 %v340, %v391
        %v394 = vmul.f32 %v341, %v392
        %395 = vmatpush.xpose.msra.mxu0 0.0
        %396 = vmatpush.xpose.msra.mxu0 0.0
        %397 = vmatpush.xpose.msra.mxu0 0.0
        %398 = vmatpush.xpose.msra.mxu0 0.0
        %399 = vmatpush.xpose.msra.mxu0 0.0
        %400 = vmatpush.xpose.msra.mxu0 0.0
        %401 = vmatpush.xpose.msra.mxu0 0.0
        %402 = vmatpush.xpose.msra.mxu0 0.0
        %403 = vmatpush.xpose.msra.mxu0 0.0
        %404 = vmatpush.xpose.msra.mxu0 0.0
        %405 = vmatpush.xpose.msra.mxu0 0.0
        %406 = vmatpush.xpose.msra.mxu0 0.0
        %407 = vmatpush.xpose.msra.mxu0 0.0
        %408 = vmatpush.xpose.msra.mxu0 0.0
        %409 = vmatpush.xpose.msra.mxu0 0.0
        %410 = vmatpush.xpose.msra.mxu0 %v393
        %411 = vmatmul.f32.gmra.mxu0 %v201
        %v412 = vpop.f32.mrf.mxu0
        %v413 = vadd.f32 0.0, %v412
        %414 = vdwg.mxu0
        %415 = vmatpush.xpose.msra.mxu0 0.0
        %416 = vmatpush.xpose.msra.mxu0 0.0
        %417 = vmatpush.xpose.msra.mxu0 0.0
        %418 = vmatpush.xpose.msra.mxu0 0.0
        %419 = vmatpush.xpose.msra.mxu0 0.0
        %420 = vmatpush.xpose.msra.mxu0 0.0
        %421 = vmatpush.xpose.msra.mxu0 0.0
        %422 = vmatpush.xpose.msra.mxu0 0.0
        %423 = vmatpush.xpose.msra.mxu0 0.0
        %424 = vmatpush.xpose.msra.mxu0 0.0
        %425 = vmatpush.xpose.msra.mxu0 0.0
        %426 = vmatpush.xpose.msra.mxu0 0.0
        %427 = vmatpush.xpose.msra.mxu0 0.0
        %428 = vmatpush.xpose.msra.mxu0 0.0
        %429 = vmatpush.xpose.msra.mxu0 0.0
        %430 = vmatpush.xpose.msra.mxu0 %v394
        %431 = vmatmul.f32.gmra.mxu0 %v202
        %v432 = vpop.f32.mrf.mxu0
        %v433 = vadd.f32 %v413, %v432
        %434 = vdwg.mxu0
        %435 = vmatpush.xpose.msra.mxu0 0.0
        %436 = vmatpush.xpose.msra.mxu0 0.0
        %437 = vmatpush.xpose.msra.mxu0 0.0
        %438 = vmatpush.xpose.msra.mxu0 0.0
        %439 = vmatpush.xpose.msra.mxu0 0.0
        %440 = vmatpush.xpose.msra.mxu0 0.0
        %441 = vmatpush.xpose.msra.mxu0 0.0
        %442 = vmatpush.xpose.msra.mxu0 0.0
        %443 = vmatpush.xpose.msra.mxu0 0.0
        %444 = vmatpush.xpose.msra.mxu0 0.0
        %445 = vmatpush.xpose.msra.mxu0 0.0
        %446 = vmatpush.xpose.msra.mxu0 0.0
        %447 = vmatpush.xpose.msra.mxu0 0.0
        %448 = vmatpush.xpose.msra.mxu0 0.0
        %449 = vmatpush.xpose.msra.mxu0 0.0
        %450 = vmatpush.xpose.msra.mxu0 %v393
        %451 = vmatmul.f32.gmra.mxu0 %v393
        %v452 = vpop.f32.mrf.mxu0
        %v453 = vadd.f32 0.0, %v452
        %454 = vdwg.mxu0
        %455 = vmatpush.xpose.msra.mxu0 0.0
        %456 = vmatpush.xpose.msra.mxu0 0.0
        %457 = vmatpush.xpose.msra.mxu0 0.0
        %458 = vmatpush.xpose.msra.mxu0 0.0
        %459 = vmatpush.xpose.msra.mxu0 0.0
        %460 = vmatpush.xpose.msra.mxu0 0.0
        %461 = vmatpush.xpose.msra.mxu0 0.0
        %462 = vmatpush.xpose.msra.mxu0 0.0
        %463 = vmatpush.xpose.msra.mxu0 0.0
        %464 = vmatpush.xpose.msra.mxu0 0.0
        %465 = vmatpush.xpose.msra.mxu0 0.0
        %466 = vmatpush.xpose.msra.mxu0 0.0
        %467 = vmatpush.xpose.msra.mxu0 0.0
        %468 = vmatpush.xpose.msra.mxu0 0.0
        %469 = vmatpush.xpose.msra.mxu0 0.0
        %470 = vmatpush.xpose.msra.mxu0 %v394
        %471 = vmatmul.f32.gmra.mxu0 %v394
        %v472 = vpop.f32.mrf.mxu0
        %v473 = vadd.f32 %v453, %v472
        %474 = vdwg.mxu0
        %v475 = vmul.f32 %v203, %v433
        %v477 = vsel %vm236, %v203, 0
        %479 = vmatpush.msra.mxu0 0.0
        %480 = vmatpush.msra.mxu0 0.0
        %481 = vmatpush.msra.mxu0 0.0
        %482 = vmatpush.msra.mxu0 0.0
        %483 = vmatpush.msra.mxu0 0.0
        %484 = vmatpush.msra.mxu0 0.0
        %485 = vmatpush.msra.mxu0 0.0
        %486 = vmatpush.msra.mxu0 0.0
        %487 = vmatpush.msra.mxu0 0.0
        %488 = vmatpush.msra.mxu0 0.0
        %489 = vmatpush.msra.mxu0 0.0
        %490 = vmatpush.msra.mxu0 0.0
        %491 = vmatpush.msra.mxu0 0.0
        %492 = vmatpush.msra.mxu0 0.0
        %493 = vmatpush.msra.mxu0 0.0
        %494 = vmatpush.msra.mxu0 %v473
        %495 = vmatmul.f32.gmra.mxu0 %v477
        %v496 = vpop.f32.mrf.mxu0
        %v497 = vadd.f32 1e-06, %v496
        %498 = vdwg.mxu0
        %v499 = vrcp.pop %v497
        %v500 = vmul.f32 %v497, %v499
        %v501 = vsub.f32 2.0, %v500
        %v502 = vmul.f32 %v499, %v501
        %v503 = vmul.f32 %v475, %v502
        %504 = vxpose.xlu0.b32.start [1/16] %v503, 128
        %505 = vxpose.xlu0.b32.cont [2/16] 0.0, 128
        %506 = vxpose.xlu0.b32.cont [3/16] 0.0, 128
        %507 = vxpose.xlu0.b32.cont [4/16] 0.0, 128
        %508 = vxpose.xlu0.b32.cont [5/16] 0.0, 128
        %509 = vxpose.xlu0.b32.cont [6/16] 0.0, 128
        %510 = vxpose.xlu0.b32.cont [7/16] 0.0, 128
        %511 = vxpose.xlu0.b32.cont [8/16] 0.0, 128
        %512 = vxpose.xlu0.b32.cont [9/16] 0.0, 128
        %513 = vxpose.xlu0.b32.cont [10/16] 0.0, 128
        %514 = vxpose.xlu0.b32.cont [11/16] 0.0, 128
        %515 = vxpose.xlu0.b32.cont [12/16] 0.0, 128
        %516 = vxpose.xlu0.b32.cont [13/16] 0.0, 128
        %517 = vxpose.xlu0.b32.cont [14/16] 0.0, 128
        %518 = vxpose.xlu0.b32.cont [15/16] 0.0, 128
        %519 = vxpose.xlu0.b32.end [16/16] 0.0, 128
        %v520 = vpop.trf.xlu0
        %v521 = vpop.trf.xlu0
        %v522 = vpop.trf.xlu0
        %v523 = vpop.trf.xlu0
        %v524 = vpop.trf.xlu0
        %v525 = vpop.trf.xlu0
        %v526 = vpop.trf.xlu0
        %v527 = vpop.trf.xlu0
        %v528 = vpop.trf.xlu0
        %v529 = vpop.trf.xlu0
        %v530 = vpop.trf.xlu0
        %v531 = vpop.trf.xlu0
        %v532 = vpop.trf.xlu0
        %v533 = vpop.trf.xlu0
        %v534 = vpop.trf.xlu0
        %v535 = vpop.trf.xlu0
        %v537 = vsel %vm236, %v520, 0
        %539 = vmatpush.msra.mxu0 0.0
        %540 = vmatpush.msra.mxu0 0.0
        %541 = vmatpush.msra.mxu0 0.0
        %542 = vmatpush.msra.mxu0 0.0
        %543 = vmatpush.msra.mxu0 0.0
        %544 = vmatpush.msra.mxu0 0.0
        %545 = vmatpush.msra.mxu0 0.0
        %546 = vmatpush.msra.mxu0 0.0
        %547 = vmatpush.msra.mxu0 0.0
        %548 = vmatpush.msra.mxu0 0.0
        %549 = vmatpush.msra.mxu0 0.0
        %550 = vmatpush.msra.mxu0 0.0
        %551 = vmatpush.msra.mxu0 0.0
        %552 = vmatpush.msra.mxu0 0.0
        %553 = vmatpush.msra.mxu0 0.0
        %554 = vmatpush.msra.mxu0 %v201
        %555 = vmatmul.f32.gmra.mxu0 %v537
        %v556 = vpop.f32.mrf.mxu0
        %v557 = vadd.f32 0.0, %v556
        %558 = vdwg.mxu0
        %559 = vmatpush.msra.mxu0 0.0
        %560 = vmatpush.msra.mxu0 0.0
        %561 = vmatpush.msra.mxu0 0.0
        %562 = vmatpush.msra.mxu0 0.0
        %563 = vmatpush.msra.mxu0 0.0
        %564 = vmatpush.msra.mxu0 0.0
        %565 = vmatpush.msra.mxu0 0.0
        %566 = vmatpush.msra.mxu0 0.0
        %567 = vmatpush.msra.mxu0 0.0
        %568 = vmatpush.msra.mxu0 0.0
        %569 = vmatpush.msra.mxu0 0.0
        %570 = vmatpush.msra.mxu0 0.0
        %571 = vmatpush.msra.mxu0 0.0
        %572 = vmatpush.msra.mxu0 0.0
        %573 = vmatpush.msra.mxu0 0.0
        %574 = vmatpush.msra.mxu0 %v202
        %575 = vmatmul.f32.gmra.mxu0 %v537
        %v576 = vpop.f32.mrf.mxu0
        %v577 = vadd.f32 0.0, %v576
        %578 = vdwg.mxu0
        %579 = vmatpush.msra.mxu0 0.0
        %580 = vmatpush.msra.mxu0 0.0
        %581 = vmatpush.msra.mxu0 0.0
        %582 = vmatpush.msra.mxu0 0.0
        %583 = vmatpush.msra.mxu0 0.0
        %584 = vmatpush.msra.mxu0 0.0
        %585 = vmatpush.msra.mxu0 0.0
        %586 = vmatpush.msra.mxu0 0.0
        %587 = vmatpush.msra.mxu0 0.0
        %588 = vmatpush.msra.mxu0 0.0
        %589 = vmatpush.msra.mxu0 0.0
        %590 = vmatpush.msra.mxu0 0.0
        %591 = vmatpush.msra.mxu0 0.0
        %592 = vmatpush.msra.mxu0 0.0
        %593 = vmatpush.msra.mxu0 0.0
        %594 = vmatpush.msra.mxu0 %v503
        %595 = vmatmul.f32.gmra.mxu0 %v537
        %v596 = vpop.f32.mrf.mxu0
        %v597 = vadd.f32 0.0, %v596
        %598 = vdwg.mxu0
        %v599 = vmul.f32 %v393, %v557
        %v600 = vmul.f32 %v394, %v577
        %v602 = vsel %vm236, %v597, 0
        %604 = vmatpush.msra.mxu0 0.0
        %605 = vmatpush.msra.mxu0 0.0
        %606 = vmatpush.msra.mxu0 0.0
        %607 = vmatpush.msra.mxu0 0.0
        %608 = vmatpush.msra.mxu0 0.0
        %609 = vmatpush.msra.mxu0 0.0
        %610 = vmatpush.msra.mxu0 0.0
        %611 = vmatpush.msra.mxu0 0.0
        %612 = vmatpush.msra.mxu0 0.0
        %613 = vmatpush.msra.mxu0 0.0
        %614 = vmatpush.msra.mxu0 0.0
        %615 = vmatpush.msra.mxu0 0.0
        %616 = vmatpush.msra.mxu0 0.0
        %617 = vmatpush.msra.mxu0 0.0
        %618 = vmatpush.msra.mxu0 0.0
        %619 = vmatpush.msra.mxu0 %v393
        %620 = vmatmul.f32.gmra.mxu0 %v602
        %v621 = vpop.f32.mrf.mxu0
        %v622 = vadd.f32 1e-06, %v621
        %623 = vdwg.mxu0
        %624 = vmatpush.msra.mxu0 0.0
        %625 = vmatpush.msra.mxu0 0.0
        %626 = vmatpush.msra.mxu0 0.0
        %627 = vmatpush.msra.mxu0 0.0
        %628 = vmatpush.msra.mxu0 0.0
        %629 = vmatpush.msra.mxu0 0.0
        %630 = vmatpush.msra.mxu0 0.0
        %631 = vmatpush.msra.mxu0 0.0
        %632 = vmatpush.msra.mxu0 0.0
        %633 = vmatpush.msra.mxu0 0.0
        %634 = vmatpush.msra.mxu0 0.0
        %635 = vmatpush.msra.mxu0 0.0
        %636 = vmatpush.msra.mxu0 0.0
        %637 = vmatpush.msra.mxu0 0.0
        %638 = vmatpush.msra.mxu0 0.0
        %639 = vmatpush.msra.mxu0 %v394
        %640 = vmatmul.f32.gmra.mxu0 %v602
        %v641 = vpop.f32.mrf.mxu0
        %v642 = vadd.f32 1e-06, %v641
        %643 = vdwg.mxu0
        %v644 = vrcp.pop %v622
        %v645 = vrcp.pop %v642
        %v646 = vmul.f32 %v622, %v644
        %v647 = vmul.f32 %v642, %v645
        %v648 = vsub.f32 2.0, %v646
        %v649 = vsub.f32 2.0, %v647
        %v650 = vmul.f32 %v644, %v648
        %v651 = vmul.f32 %v645, %v649
        %v652 = vmul.f32 %v599, %v650
        %v653 = vmul.f32 %v600, %v651
        %654 = vmatpush.xpose.msra.mxu0 0.0
        %655 = vmatpush.xpose.msra.mxu0 0.0
        %656 = vmatpush.xpose.msra.mxu0 0.0
        %657 = vmatpush.xpose.msra.mxu0 0.0
        %658 = vmatpush.xpose.msra.mxu0 0.0
        %659 = vmatpush.xpose.msra.mxu0 0.0
        %660 = vmatpush.xpose.msra.mxu0 0.0
        %661 = vmatpush.xpose.msra.mxu0 0.0
        %662 = vmatpush.xpose.msra.mxu0 0.0
        %663 = vmatpush.xpose.msra.mxu0 0.0
        %664 = vmatpush.xpose.msra.mxu0 0.0
        %665 = vmatpush.xpose.msra.mxu0 0.0
        %666 = vmatpush.xpose.msra.mxu0 0.0
        %667 = vmatpush.xpose.msra.mxu0 0.0
        %668 = vmatpush.xpose.msra.mxu0 0.0
        %669 = vmatpush.xpose.msra.mxu0 %v652
        %670 = vmatmul.f32.gmra.mxu0 %v201
        %v671 = vpop.f32.mrf.mxu0
        %v672 = vadd.f32 0.0, %v671
        %673 = vdwg.mxu0
        %674 = vmatpush.xpose.msra.mxu0 0.0
        %675 = vmatpush.xpose.msra.mxu0 0.0
        %676 = vmatpush.xpose.msra.mxu0 0.0
        %677 = vmatpush.xpose.msra.mxu0 0.0
        %678 = vmatpush.xpose.msra.mxu0 0.0
        %679 = vmatpush.xpose.msra.mxu0 0.0
        %680 = vmatpush.xpose.msra.mxu0 0.0
        %681 = vmatpush.xpose.msra.mxu0 0.0
        %682 = vmatpush.xpose.msra.mxu0 0.0
        %683 = vmatpush.xpose.msra.mxu0 0.0
        %684 = vmatpush.xpose.msra.mxu0 0.0
        %685 = vmatpush.xpose.msra.mxu0 0.0
        %686 = vmatpush.xpose.msra.mxu0 0.0
        %687 = vmatpush.xpose.msra.mxu0 0.0
        %688 = vmatpush.xpose.msra.mxu0 0.0
        %689 = vmatpush.xpose.msra.mxu0 %v653
        %690 = vmatmul.f32.gmra.mxu0 %v202
        %v691 = vpop.f32.mrf.mxu0
        %v692 = vadd.f32 %v672, %v691
        %693 = vdwg.mxu0
        %694 = vmatpush.xpose.msra.mxu0 0.0
        %695 = vmatpush.xpose.msra.mxu0 0.0
        %696 = vmatpush.xpose.msra.mxu0 0.0
        %697 = vmatpush.xpose.msra.mxu0 0.0
        %698 = vmatpush.xpose.msra.mxu0 0.0
        %699 = vmatpush.xpose.msra.mxu0 0.0
        %700 = vmatpush.xpose.msra.mxu0 0.0
        %701 = vmatpush.xpose.msra.mxu0 0.0
        %702 = vmatpush.xpose.msra.mxu0 0.0
        %703 = vmatpush.xpose.msra.mxu0 0.0
        %704 = vmatpush.xpose.msra.mxu0 0.0
        %705 = vmatpush.xpose.msra.mxu0 0.0
        %706 = vmatpush.xpose.msra.mxu0 0.0
        %707 = vmatpush.xpose.msra.mxu0 0.0
        %708 = vmatpush.xpose.msra.mxu0 0.0
        %709 = vmatpush.xpose.msra.mxu0 %v652
        %710 = vmatmul.f32.gmra.mxu0 %v652
        %v711 = vpop.f32.mrf.mxu0
        %v712 = vadd.f32 0.0, %v711
        %713 = vdwg.mxu0
        %714 = vmatpush.xpose.msra.mxu0 0.0
        %715 = vmatpush.xpose.msra.mxu0 0.0
        %716 = vmatpush.xpose.msra.mxu0 0.0
        %717 = vmatpush.xpose.msra.mxu0 0.0
        %718 = vmatpush.xpose.msra.mxu0 0.0
        %719 = vmatpush.xpose.msra.mxu0 0.0
        %720 = vmatpush.xpose.msra.mxu0 0.0
        %721 = vmatpush.xpose.msra.mxu0 0.0
        %722 = vmatpush.xpose.msra.mxu0 0.0
        %723 = vmatpush.xpose.msra.mxu0 0.0
        %724 = vmatpush.xpose.msra.mxu0 0.0
        %725 = vmatpush.xpose.msra.mxu0 0.0
        %726 = vmatpush.xpose.msra.mxu0 0.0
        %727 = vmatpush.xpose.msra.mxu0 0.0
        %728 = vmatpush.xpose.msra.mxu0 0.0
        %729 = vmatpush.xpose.msra.mxu0 %v653
        %730 = vmatmul.f32.gmra.mxu0 %v653
        %v731 = vpop.f32.mrf.mxu0
        %v732 = vadd.f32 %v712, %v731
        %733 = vdwg.mxu0
        %v734 = vmul.f32 %v503, %v692
        %v736 = vsel %vm236, %v503, 0
        %738 = vmatpush.msra.mxu0 0.0
        %739 = vmatpush.msra.mxu0 0.0
        %740 = vmatpush.msra.mxu0 0.0
        %741 = vmatpush.msra.mxu0 0.0
        %742 = vmatpush.msra.mxu0 0.0
        %743 = vmatpush.msra.mxu0 0.0
        %744 = vmatpush.msra.mxu0 0.0
        %745 = vmatpush.msra.mxu0 0.0
        %746 = vmatpush.msra.mxu0 0.0
        %747 = vmatpush.msra.mxu0 0.0
        %748 = vmatpush.msra.mxu0 0.0
        %749 = vmatpush.msra.mxu0 0.0
        %750 = vmatpush.msra.mxu0 0.0
        %751 = vmatpush.msra.mxu0 0.0
        %752 = vmatpush.msra.mxu0 0.0
        %753 = vmatpush.msra.mxu0 %v732
        %754 = vmatmul.f32.gmra.mxu0 %v736
        %v755 = vpop.f32.mrf.mxu0
        %v756 = vadd.f32 1e-06, %v755
        %757 = vdwg.mxu0
        %v758 = vrcp.pop %v756
        %v759 = vmul.f32 %v756, %v758
        %v760 = vsub.f32 2.0, %v759
        %v761 = vmul.f32 %v758, %v760
        %v762 = vmul.f32 %v734, %v761
        %763 = vxpose.xlu0.b32.start [1/16] %v762, 128
        %764 = vxpose.xlu0.b32.cont [2/16] 0.0, 128
        %765 = vxpose.xlu0.b32.cont [3/16] 0.0, 128
        %766 = vxpose.xlu0.b32.cont [4/16] 0.0, 128
        %767 = vxpose.xlu0.b32.cont [5/16] 0.0, 128
        %768 = vxpose.xlu0.b32.cont [6/16] 0.0, 128
        %769 = vxpose.xlu0.b32.cont [7/16] 0.0, 128
        %770 = vxpose.xlu0.b32.cont [8/16] 0.0, 128
        %771 = vxpose.xlu0.b32.cont [9/16] 0.0, 128
        %772 = vxpose.xlu0.b32.cont [10/16] 0.0, 128
        %773 = vxpose.xlu0.b32.cont [11/16] 0.0, 128
        %774 = vxpose.xlu0.b32.cont [12/16] 0.0, 128
        %775 = vxpose.xlu0.b32.cont [13/16] 0.0, 128
        %776 = vxpose.xlu0.b32.cont [14/16] 0.0, 128
        %777 = vxpose.xlu0.b32.cont [15/16] 0.0, 128
        %778 = vxpose.xlu0.b32.end [16/16] 0.0, 128
        %v779 = vpop.trf.xlu0
        %v780 = vpop.trf.xlu0
        %v781 = vpop.trf.xlu0
        %v782 = vpop.trf.xlu0
        %v783 = vpop.trf.xlu0
        %v784 = vpop.trf.xlu0
        %v785 = vpop.trf.xlu0
        %v786 = vpop.trf.xlu0
        %v787 = vpop.trf.xlu0
        %v788 = vpop.trf.xlu0
        %v789 = vpop.trf.xlu0
        %v790 = vpop.trf.xlu0
        %v791 = vpop.trf.xlu0
        %v792 = vpop.trf.xlu0
        %v793 = vpop.trf.xlu0
        %v794 = vpop.trf.xlu0
        %v796 = vsel %vm236, %v779, 0
        %798 = vmatpush.msra.mxu0 0.0
        %799 = vmatpush.msra.mxu0 0.0
        %800 = vmatpush.msra.mxu0 0.0
        %801 = vmatpush.msra.mxu0 0.0
        %802 = vmatpush.msra.mxu0 0.0
        %803 = vmatpush.msra.mxu0 0.0
        %804 = vmatpush.msra.mxu0 0.0
        %805 = vmatpush.msra.mxu0 0.0
        %806 = vmatpush.msra.mxu0 0.0
        %807 = vmatpush.msra.mxu0 0.0
        %808 = vmatpush.msra.mxu0 0.0
        %809 = vmatpush.msra.mxu0 0.0
        %810 = vmatpush.msra.mxu0 0.0
        %811 = vmatpush.msra.mxu0 0.0
        %812 = vmatpush.msra.mxu0 0.0
        %813 = vmatpush.msra.mxu0 %v201
        %814 = vmatmul.f32.gmra.mxu0 %v796
        %v815 = vpop.f32.mrf.mxu0
        %v816 = vadd.f32 0.0, %v815
        %817 = vdwg.mxu0
        %818 = vmatpush.msra.mxu0 0.0
        %819 = vmatpush.msra.mxu0 0.0
        %820 = vmatpush.msra.mxu0 0.0
        %821 = vmatpush.msra.mxu0 0.0
        %822 = vmatpush.msra.mxu0 0.0
        %823 = vmatpush.msra.mxu0 0.0
        %824 = vmatpush.msra.mxu0 0.0
        %825 = vmatpush.msra.mxu0 0.0
        %826 = vmatpush.msra.mxu0 0.0
        %827 = vmatpush.msra.mxu0 0.0
        %828 = vmatpush.msra.mxu0 0.0
        %829 = vmatpush.msra.mxu0 0.0
        %830 = vmatpush.msra.mxu0 0.0
        %831 = vmatpush.msra.mxu0 0.0
        %832 = vmatpush.msra.mxu0 0.0
        %833 = vmatpush.msra.mxu0 %v202
        %834 = vmatmul.f32.gmra.mxu0 %v796
        %v835 = vpop.f32.mrf.mxu0
        %v836 = vadd.f32 0.0, %v835
        %837 = vdwg.mxu0
        %838 = vmatpush.msra.mxu0 0.0
        %839 = vmatpush.msra.mxu0 0.0
        %840 = vmatpush.msra.mxu0 0.0
        %841 = vmatpush.msra.mxu0 0.0
        %842 = vmatpush.msra.mxu0 0.0
        %843 = vmatpush.msra.mxu0 0.0
        %844 = vmatpush.msra.mxu0 0.0
        %845 = vmatpush.msra.mxu0 0.0
        %846 = vmatpush.msra.mxu0 0.0
        %847 = vmatpush.msra.mxu0 0.0
        %848 = vmatpush.msra.mxu0 0.0
        %849 = vmatpush.msra.mxu0 0.0
        %850 = vmatpush.msra.mxu0 0.0
        %851 = vmatpush.msra.mxu0 0.0
        %852 = vmatpush.msra.mxu0 0.0
        %853 = vmatpush.msra.mxu0 %v762
        %854 = vmatmul.f32.gmra.mxu0 %v796
        %v855 = vpop.f32.mrf.mxu0
        %v856 = vadd.f32 0.0, %v855
        %857 = vdwg.mxu0
        %v858 = vmul.f32 %v652, %v816
        %v859 = vmul.f32 %v653, %v836
        %v861 = vsel %vm236, %v856, 0
        %863 = vmatpush.msra.mxu0 0.0
        %864 = vmatpush.msra.mxu0 0.0
        %865 = vmatpush.msra.mxu0 0.0
        %866 = vmatpush.msra.mxu0 0.0
        %867 = vmatpush.msra.mxu0 0.0
        %868 = vmatpush.msra.mxu0 0.0
        %869 = vmatpush.msra.mxu0 0.0
        %870 = vmatpush.msra.mxu0 0.0
        %871 = vmatpush.msra.mxu0 0.0
        %872 = vmatpush.msra.mxu0 0.0
        %873 = vmatpush.msra.mxu0 0.0
        %874 = vmatpush.msra.mxu0 0.0
        %875 = vmatpush.msra.mxu0 0.0
        %876 = vmatpush.msra.mxu0 0.0
        %877 = vmatpush.msra.mxu0 0.0
        %878 = vmatpush.msra.mxu0 %v652
        %879 = vmatmul.f32.gmra.mxu0 %v861
        %v880 = vpop.f32.mrf.mxu0
        %v881 = vadd.f32 1e-06, %v880
        %882 = vdwg.mxu0
        %883 = vmatpush.msra.mxu0 0.0
        %884 = vmatpush.msra.mxu0 0.0
        %885 = vmatpush.msra.mxu0 0.0
        %886 = vmatpush.msra.mxu0 0.0
        %887 = vmatpush.msra.mxu0 0.0
        %888 = vmatpush.msra.mxu0 0.0
        %889 = vmatpush.msra.mxu0 0.0
        %890 = vmatpush.msra.mxu0 0.0
        %891 = vmatpush.msra.mxu0 0.0
        %892 = vmatpush.msra.mxu0 0.0
        %893 = vmatpush.msra.mxu0 0.0
        %894 = vmatpush.msra.mxu0 0.0
        %895 = vmatpush.msra.mxu0 0.0
        %896 = vmatpush.msra.mxu0 0.0
        %897 = vmatpush.msra.mxu0 0.0
        %898 = vmatpush.msra.mxu0 %v653
        %899 = vmatmul.f32.gmra.mxu0 %v861
        %v900 = vpop.f32.mrf.mxu0
        %v901 = vadd.f32 1e-06, %v900
        %902 = vdwg.mxu0
        %v903 = vrcp.pop %v881
        %v904 = vrcp.pop %v901
        %v905 = vmul.f32 %v881, %v903
        %v906 = vmul.f32 %v901, %v904
        %v907 = vsub.f32 2.0, %v905
        %v908 = vsub.f32 2.0, %v906
        %v909 = vmul.f32 %v903, %v907
        %v910 = vmul.f32 %v904, %v908
        %v911 = vmul.f32 %v858, %v909
        %v912 = vmul.f32 %v859, %v910
        %913 = vmatpush.xpose.msra.mxu0 0.0
        %914 = vmatpush.xpose.msra.mxu0 0.0
        %915 = vmatpush.xpose.msra.mxu0 0.0
        %916 = vmatpush.xpose.msra.mxu0 0.0
        %917 = vmatpush.xpose.msra.mxu0 0.0
        %918 = vmatpush.xpose.msra.mxu0 0.0
        %919 = vmatpush.xpose.msra.mxu0 0.0
        %920 = vmatpush.xpose.msra.mxu0 0.0
        %921 = vmatpush.xpose.msra.mxu0 0.0
        %922 = vmatpush.xpose.msra.mxu0 0.0
        %923 = vmatpush.xpose.msra.mxu0 0.0
        %924 = vmatpush.xpose.msra.mxu0 0.0
        %925 = vmatpush.xpose.msra.mxu0 0.0
        %926 = vmatpush.xpose.msra.mxu0 0.0
        %927 = vmatpush.xpose.msra.mxu0 0.0
        %928 = vmatpush.xpose.msra.mxu0 %v911
        %929 = vmatmul.f32.gmra.mxu0 %v201
        %v930 = vpop.f32.mrf.mxu0
        %v931 = vadd.f32 0.0, %v930
        %932 = vdwg.mxu0
        %933 = vmatpush.xpose.msra.mxu0 0.0
        %934 = vmatpush.xpose.msra.mxu0 0.0
        %935 = vmatpush.xpose.msra.mxu0 0.0
        %936 = vmatpush.xpose.msra.mxu0 0.0
        %937 = vmatpush.xpose.msra.mxu0 0.0
        %938 = vmatpush.xpose.msra.mxu0 0.0
        %939 = vmatpush.xpose.msra.mxu0 0.0
        %940 = vmatpush.xpose.msra.mxu0 0.0
        %941 = vmatpush.xpose.msra.mxu0 0.0
        %942 = vmatpush.xpose.msra.mxu0 0.0
        %943 = vmatpush.xpose.msra.mxu0 0.0
        %944 = vmatpush.xpose.msra.mxu0 0.0
        %945 = vmatpush.xpose.msra.mxu0 0.0
        %946 = vmatpush.xpose.msra.mxu0 0.0
        %947 = vmatpush.xpose.msra.mxu0 0.0
        %948 = vmatpush.xpose.msra.mxu0 %v912
        %949 = vmatmul.f32.gmra.mxu0 %v202
        %v950 = vpop.f32.mrf.mxu0
        %v951 = vadd.f32 %v931, %v950
        %952 = vdwg.mxu0
        %953 = vmatpush.xpose.msra.mxu0 0.0
        %954 = vmatpush.xpose.msra.mxu0 0.0
        %955 = vmatpush.xpose.msra.mxu0 0.0
        %956 = vmatpush.xpose.msra.mxu0 0.0
        %957 = vmatpush.xpose.msra.mxu0 0.0
        %958 = vmatpush.xpose.msra.mxu0 0.0
        %959 = vmatpush.xpose.msra.mxu0 0.0
        %960 = vmatpush.xpose.msra.mxu0 0.0
        %961 = vmatpush.xpose.msra.mxu0 0.0
        %962 = vmatpush.xpose.msra.mxu0 0.0
        %963 = vmatpush.xpose.msra.mxu0 0.0
        %964 = vmatpush.xpose.msra.mxu0 0.0
        %965 = vmatpush.xpose.msra.mxu0 0.0
        %966 = vmatpush.xpose.msra.mxu0 0.0
        %967 = vmatpush.xpose.msra.mxu0 0.0
        %968 = vmatpush.xpose.msra.mxu0 %v911
        %969 = vmatmul.f32.gmra.mxu0 %v911
        %v970 = vpop.f32.mrf.mxu0
        %v971 = vadd.f32 0.0, %v970
        %972 = vdwg.mxu0
        %973 = vmatpush.xpose.msra.mxu0 0.0
        %974 = vmatpush.xpose.msra.mxu0 0.0
        %975 = vmatpush.xpose.msra.mxu0 0.0
        %976 = vmatpush.xpose.msra.mxu0 0.0
        %977 = vmatpush.xpose.msra.mxu0 0.0
        %978 = vmatpush.xpose.msra.mxu0 0.0
        %979 = vmatpush.xpose.msra.mxu0 0.0
        %980 = vmatpush.xpose.msra.mxu0 0.0
        %981 = vmatpush.xpose.msra.mxu0 0.0
        %982 = vmatpush.xpose.msra.mxu0 0.0
        %983 = vmatpush.xpose.msra.mxu0 0.0
        %984 = vmatpush.xpose.msra.mxu0 0.0
        %985 = vmatpush.xpose.msra.mxu0 0.0
        %986 = vmatpush.xpose.msra.mxu0 0.0
        %987 = vmatpush.xpose.msra.mxu0 0.0
        %988 = vmatpush.xpose.msra.mxu0 %v912
        %989 = vmatmul.f32.gmra.mxu0 %v912
        %v990 = vpop.f32.mrf.mxu0
        %v991 = vadd.f32 %v971, %v990
        %992 = vdwg.mxu0
        %v993 = vmul.f32 %v762, %v951
        %v995 = vsel %vm236, %v762, 0
        %997 = vmatpush.msra.mxu0 0.0
        %998 = vmatpush.msra.mxu0 0.0
        %999 = vmatpush.msra.mxu0 0.0
        %1000 = vmatpush.msra.mxu0 0.0
        %1001 = vmatpush.msra.mxu0 0.0
        %1002 = vmatpush.msra.mxu0 0.0
        %1003 = vmatpush.msra.mxu0 0.0
        %1004 = vmatpush.msra.mxu0 0.0
        %1005 = vmatpush.msra.mxu0 0.0
        %1006 = vmatpush.msra.mxu0 0.0
        %1007 = vmatpush.msra.mxu0 0.0
        %1008 = vmatpush.msra.mxu0 0.0
        %1009 = vmatpush.msra.mxu0 0.0
        %1010 = vmatpush.msra.mxu0 0.0
        %1011 = vmatpush.msra.mxu0 0.0
        %1012 = vmatpush.msra.mxu0 %v991
        %1013 = vmatmul.f32.gmra.mxu0 %v995
        %v1014 = vpop.f32.mrf.mxu0
        %v1015 = vadd.f32 1e-06, %v1014
        %1016 = vdwg.mxu0
        %v1017 = vrcp.pop %v1015
        %v1018 = vmul.f32 %v1015, %v1017
        %v1019 = vsub.f32 2.0, %v1018
        %v1020 = vmul.f32 %v1017, %v1019
        %v1021 = vmul.f32 %v993, %v1020
        %1022 = vxpose.xlu0.b32.start [1/16] %v1021, 128
        %1023 = vxpose.xlu0.b32.cont [2/16] 0.0, 128
        %1024 = vxpose.xlu0.b32.cont [3/16] 0.0, 128
        %1025 = vxpose.xlu0.b32.cont [4/16] 0.0, 128
        %1026 = vxpose.xlu0.b32.cont [5/16] 0.0, 128
        %1027 = vxpose.xlu0.b32.cont [6/16] 0.0, 128
        %1028 = vxpose.xlu0.b32.cont [7/16] 0.0, 128
        %1029 = vxpose.xlu0.b32.cont [8/16] 0.0, 128
        %1030 = vxpose.xlu0.b32.cont [9/16] 0.0, 128
        %1031 = vxpose.xlu0.b32.cont [10/16] 0.0, 128
        %1032 = vxpose.xlu0.b32.cont [11/16] 0.0, 128
        %1033 = vxpose.xlu0.b32.cont [12/16] 0.0, 128
        %1034 = vxpose.xlu0.b32.cont [13/16] 0.0, 128
        %1035 = vxpose.xlu0.b32.cont [14/16] 0.0, 128
        %1036 = vxpose.xlu0.b32.cont [15/16] 0.0, 128
        %1037 = vxpose.xlu0.b32.end [16/16] 0.0, 128
        %v1038 = vpop.trf.xlu0
        %v1039 = vpop.trf.xlu0
        %v1040 = vpop.trf.xlu0
        %v1041 = vpop.trf.xlu0
        %v1042 = vpop.trf.xlu0
        %v1043 = vpop.trf.xlu0
        %v1044 = vpop.trf.xlu0
        %v1045 = vpop.trf.xlu0
        %v1046 = vpop.trf.xlu0
        %v1047 = vpop.trf.xlu0
        %v1048 = vpop.trf.xlu0
        %v1049 = vpop.trf.xlu0
        %v1050 = vpop.trf.xlu0
        %v1051 = vpop.trf.xlu0
        %v1052 = vpop.trf.xlu0
        %v1053 = vpop.trf.xlu0
        %v1055 = vsel %vm236, %v1038, 0
        %1057 = vmatpush.msra.mxu0 0.0
        %1058 = vmatpush.msra.mxu0 0.0
        %1059 = vmatpush.msra.mxu0 0.0
        %1060 = vmatpush.msra.mxu0 0.0
        %1061 = vmatpush.msra.mxu0 0.0
        %1062 = vmatpush.msra.mxu0 0.0
        %1063 = vmatpush.msra.mxu0 0.0
        %1064 = vmatpush.msra.mxu0 0.0
        %1065 = vmatpush.msra.mxu0 0.0
        %1066 = vmatpush.msra.mxu0 0.0
        %1067 = vmatpush.msra.mxu0 0.0
        %1068 = vmatpush.msra.mxu0 0.0
        %1069 = vmatpush.msra.mxu0 0.0
        %1070 = vmatpush.msra.mxu0 0.0
        %1071 = vmatpush.msra.mxu0 0.0
        %1072 = vmatpush.msra.mxu0 %v201
        %1073 = vmatmul.f32.gmra.mxu0 %v1055
        %v1074 = vpop.f32.mrf.mxu0
        %v1075 = vadd.f32 0.0, %v1074
        %1076 = vdwg.mxu0
        %1077 = vmatpush.msra.mxu0 0.0
        %1078 = vmatpush.msra.mxu0 0.0
        %1079 = vmatpush.msra.mxu0 0.0
        %1080 = vmatpush.msra.mxu0 0.0
        %1081 = vmatpush.msra.mxu0 0.0
        %1082 = vmatpush.msra.mxu0 0.0
        %1083 = vmatpush.msra.mxu0 0.0
        %1084 = vmatpush.msra.mxu0 0.0
        %1085 = vmatpush.msra.mxu0 0.0
        %1086 = vmatpush.msra.mxu0 0.0
        %1087 = vmatpush.msra.mxu0 0.0
        %1088 = vmatpush.msra.mxu0 0.0
        %1089 = vmatpush.msra.mxu0 0.0
        %1090 = vmatpush.msra.mxu0 0.0
        %1091 = vmatpush.msra.mxu0 0.0
        %1092 = vmatpush.msra.mxu0 %v202
        %1093 = vmatmul.f32.gmra.mxu0 %v1055
        %v1094 = vpop.f32.mrf.mxu0
        %v1095 = vadd.f32 0.0, %v1094
        %1096 = vdwg.mxu0
        %1097 = vmatpush.msra.mxu0 0.0
        %1098 = vmatpush.msra.mxu0 0.0
        %1099 = vmatpush.msra.mxu0 0.0
        %1100 = vmatpush.msra.mxu0 0.0
        %1101 = vmatpush.msra.mxu0 0.0
        %1102 = vmatpush.msra.mxu0 0.0
        %1103 = vmatpush.msra.mxu0 0.0
        %1104 = vmatpush.msra.mxu0 0.0
        %1105 = vmatpush.msra.mxu0 0.0
        %1106 = vmatpush.msra.mxu0 0.0
        %1107 = vmatpush.msra.mxu0 0.0
        %1108 = vmatpush.msra.mxu0 0.0
        %1109 = vmatpush.msra.mxu0 0.0
        %1110 = vmatpush.msra.mxu0 0.0
        %1111 = vmatpush.msra.mxu0 0.0
        %1112 = vmatpush.msra.mxu0 %v1021
        %1113 = vmatmul.f32.gmra.mxu0 %v1055
        %v1114 = vpop.f32.mrf.mxu0
        %v1115 = vadd.f32 0.0, %v1114
        %1116 = vdwg.mxu0
        %v1117 = vmul.f32 %v911, %v1075
        %v1118 = vmul.f32 %v912, %v1095
        %v1120 = vsel %vm236, %v1115, 0
        %1122 = vmatpush.msra.mxu0 0.0
        %1123 = vmatpush.msra.mxu0 0.0
        %1124 = vmatpush.msra.mxu0 0.0
        %1125 = vmatpush.msra.mxu0 0.0
        %1126 = vmatpush.msra.mxu0 0.0
        %1127 = vmatpush.msra.mxu0 0.0
        %1128 = vmatpush.msra.mxu0 0.0
        %1129 = vmatpush.msra.mxu0 0.0
        %1130 = vmatpush.msra.mxu0 0.0
        %1131 = vmatpush.msra.mxu0 0.0
        %1132 = vmatpush.msra.mxu0 0.0
        %1133 = vmatpush.msra.mxu0 0.0
        %1134 = vmatpush.msra.mxu0 0.0
        %1135 = vmatpush.msra.mxu0 0.0
        %1136 = vmatpush.msra.mxu0 0.0
        %1137 = vmatpush.msra.mxu0 %v911
        %1138 = vmatmul.f32.gmra.mxu0 %v1120
        %v1139 = vpop.f32.mrf.mxu0
        %v1140 = vadd.f32 1e-06, %v1139
        %1141 = vdwg.mxu0
        %1142 = vmatpush.msra.mxu0 0.0
        %1143 = vmatpush.msra.mxu0 0.0
        %1144 = vmatpush.msra.mxu0 0.0
        %1145 = vmatpush.msra.mxu0 0.0
        %1146 = vmatpush.msra.mxu0 0.0
        %1147 = vmatpush.msra.mxu0 0.0
        %1148 = vmatpush.msra.mxu0 0.0
        %1149 = vmatpush.msra.mxu0 0.0
        %1150 = vmatpush.msra.mxu0 0.0
        %1151 = vmatpush.msra.mxu0 0.0
        %1152 = vmatpush.msra.mxu0 0.0
        %1153 = vmatpush.msra.mxu0 0.0
        %1154 = vmatpush.msra.mxu0 0.0
        %1155 = vmatpush.msra.mxu0 0.0
        %1156 = vmatpush.msra.mxu0 0.0
        %1157 = vmatpush.msra.mxu0 %v912
        %1158 = vmatmul.f32.gmra.mxu0 %v1120
        %v1159 = vpop.f32.mrf.mxu0
        %v1160 = vadd.f32 1e-06, %v1159
        %1161 = vdwg.mxu0
        %v1162 = vrcp.pop %v1140
        %v1163 = vrcp.pop %v1160
        %v1164 = vmul.f32 %v1140, %v1162
        %v1165 = vmul.f32 %v1160, %v1163
        %v1166 = vsub.f32 2.0, %v1164
        %v1167 = vsub.f32 2.0, %v1165
        %v1168 = vmul.f32 %v1162, %v1166
        %v1169 = vmul.f32 %v1163, %v1167
        %v1170 = vmul.f32 %v1117, %v1168
        %v1171 = vmul.f32 %v1118, %v1169
        %1172 = vmatpush.xpose.msra.mxu0 0.0
        %1173 = vmatpush.xpose.msra.mxu0 0.0
        %1174 = vmatpush.xpose.msra.mxu0 0.0
        %1175 = vmatpush.xpose.msra.mxu0 0.0
        %1176 = vmatpush.xpose.msra.mxu0 0.0
        %1177 = vmatpush.xpose.msra.mxu0 0.0
        %1178 = vmatpush.xpose.msra.mxu0 0.0
        %1179 = vmatpush.xpose.msra.mxu0 0.0
        %1180 = vmatpush.xpose.msra.mxu0 0.0
        %1181 = vmatpush.xpose.msra.mxu0 0.0
        %1182 = vmatpush.xpose.msra.mxu0 0.0
        %1183 = vmatpush.xpose.msra.mxu0 0.0
        %1184 = vmatpush.xpose.msra.mxu0 0.0
        %1185 = vmatpush.xpose.msra.mxu0 0.0
        %1186 = vmatpush.xpose.msra.mxu0 0.0
        %1187 = vmatpush.xpose.msra.mxu0 %v1170
        %1188 = vmatmul.f32.gmra.mxu0 %v201
        %v1189 = vpop.f32.mrf.mxu0
        %v1190 = vadd.f32 0.0, %v1189
        %1191 = vdwg.mxu0
        %1192 = vmatpush.xpose.msra.mxu0 0.0
        %1193 = vmatpush.xpose.msra.mxu0 0.0
        %1194 = vmatpush.xpose.msra.mxu0 0.0
        %1195 = vmatpush.xpose.msra.mxu0 0.0
        %1196 = vmatpush.xpose.msra.mxu0 0.0
        %1197 = vmatpush.xpose.msra.mxu0 0.0
        %1198 = vmatpush.xpose.msra.mxu0 0.0
        %1199 = vmatpush.xpose.msra.mxu0 0.0
        %1200 = vmatpush.xpose.msra.mxu0 0.0
        %1201 = vmatpush.xpose.msra.mxu0 0.0
        %1202 = vmatpush.xpose.msra.mxu0 0.0
        %1203 = vmatpush.xpose.msra.mxu0 0.0
        %1204 = vmatpush.xpose.msra.mxu0 0.0
        %1205 = vmatpush.xpose.msra.mxu0 0.0
        %1206 = vmatpush.xpose.msra.mxu0 0.0
        %1207 = vmatpush.xpose.msra.mxu0 %v1171
        %1208 = vmatmul.f32.gmra.mxu0 %v202
        %v1209 = vpop.f32.mrf.mxu0
        %v1210 = vadd.f32 %v1190, %v1209
        %1211 = vdwg.mxu0
        %1212 = vmatpush.xpose.msra.mxu0 0.0
        %1213 = vmatpush.xpose.msra.mxu0 0.0
        %1214 = vmatpush.xpose.msra.mxu0 0.0
        %1215 = vmatpush.xpose.msra.mxu0 0.0
        %1216 = vmatpush.xpose.msra.mxu0 0.0
        %1217 = vmatpush.xpose.msra.mxu0 0.0
        %1218 = vmatpush.xpose.msra.mxu0 0.0
        %1219 = vmatpush.xpose.msra.mxu0 0.0
        %1220 = vmatpush.xpose.msra.mxu0 0.0
        %1221 = vmatpush.xpose.msra.mxu0 0.0
        %1222 = vmatpush.xpose.msra.mxu0 0.0
        %1223 = vmatpush.xpose.msra.mxu0 0.0
        %1224 = vmatpush.xpose.msra.mxu0 0.0
        %1225 = vmatpush.xpose.msra.mxu0 0.0
        %1226 = vmatpush.xpose.msra.mxu0 0.0
        %1227 = vmatpush.xpose.msra.mxu0 %v1170
        %1228 = vmatmul.f32.gmra.mxu0 %v1170
        %v1229 = vpop.f32.mrf.mxu0
        %v1230 = vadd.f32 0.0, %v1229
        %1231 = vdwg.mxu0
        %1232 = vmatpush.xpose.msra.mxu0 0.0
        %1233 = vmatpush.xpose.msra.mxu0 0.0
        %1234 = vmatpush.xpose.msra.mxu0 0.0
        %1235 = vmatpush.xpose.msra.mxu0 0.0
        %1236 = vmatpush.xpose.msra.mxu0 0.0
        %1237 = vmatpush.xpose.msra.mxu0 0.0
        %1238 = vmatpush.xpose.msra.mxu0 0.0
        %1239 = vmatpush.xpose.msra.mxu0 0.0
        %1240 = vmatpush.xpose.msra.mxu0 0.0
        %1241 = vmatpush.xpose.msra.mxu0 0.0
        %1242 = vmatpush.xpose.msra.mxu0 0.0
        %1243 = vmatpush.xpose.msra.mxu0 0.0
        %1244 = vmatpush.xpose.msra.mxu0 0.0
        %1245 = vmatpush.xpose.msra.mxu0 0.0
        %1246 = vmatpush.xpose.msra.mxu0 0.0
        %1247 = vmatpush.xpose.msra.mxu0 %v1171
        %1248 = vmatmul.f32.gmra.mxu0 %v1171
        %v1249 = vpop.f32.mrf.mxu0
        %v1250 = vadd.f32 %v1230, %v1249
        %1251 = vdwg.mxu0
        %v1252 = vmul.f32 %v1021, %v1210
        %v1254 = vsel %vm236, %v1021, 0
        %1256 = vmatpush.msra.mxu0 0.0
        %1257 = vmatpush.msra.mxu0 0.0
        %1258 = vmatpush.msra.mxu0 0.0
        %1259 = vmatpush.msra.mxu0 0.0
        %1260 = vmatpush.msra.mxu0 0.0
        %1261 = vmatpush.msra.mxu0 0.0
        %1262 = vmatpush.msra.mxu0 0.0
        %1263 = vmatpush.msra.mxu0 0.0
        %1264 = vmatpush.msra.mxu0 0.0
        %1265 = vmatpush.msra.mxu0 0.0
        %1266 = vmatpush.msra.mxu0 0.0
        %1267 = vmatpush.msra.mxu0 0.0
        %1268 = vmatpush.msra.mxu0 0.0
        %1269 = vmatpush.msra.mxu0 0.0
        %1270 = vmatpush.msra.mxu0 0.0
        %1271 = vmatpush.msra.mxu0 %v1250
        %1272 = vmatmul.f32.gmra.mxu0 %v1254
        %v1273 = vpop.f32.mrf.mxu0
        %v1274 = vadd.f32 1e-06, %v1273
        %1275 = vdwg.mxu0
        %v1276 = vrcp.pop %v1274
        %v1277 = vmul.f32 %v1274, %v1276
        %v1278 = vsub.f32 2.0, %v1277
        %v1279 = vmul.f32 %v1276, %v1278
        %v1280 = vmul.f32 %v1252, %v1279
        %1281 = vxpose.xlu0.b32.start [1/16] %v1280, 128
        %1282 = vxpose.xlu0.b32.cont [2/16] 0.0, 128
        %1283 = vxpose.xlu0.b32.cont [3/16] 0.0, 128
        %1284 = vxpose.xlu0.b32.cont [4/16] 0.0, 128
        %1285 = vxpose.xlu0.b32.cont [5/16] 0.0, 128
        %1286 = vxpose.xlu0.b32.cont [6/16] 0.0, 128
        %1287 = vxpose.xlu0.b32.cont [7/16] 0.0, 128
        %1288 = vxpose.xlu0.b32.cont [8/16] 0.0, 128
        %1289 = vxpose.xlu0.b32.cont [9/16] 0.0, 128
        %1290 = vxpose.xlu0.b32.cont [10/16] 0.0, 128
        %1291 = vxpose.xlu0.b32.cont [11/16] 0.0, 128
        %1292 = vxpose.xlu0.b32.cont [12/16] 0.0, 128
        %1293 = vxpose.xlu0.b32.cont [13/16] 0.0, 128
        %1294 = vxpose.xlu0.b32.cont [14/16] 0.0, 128
        %1295 = vxpose.xlu0.b32.cont [15/16] 0.0, 128
        %1296 = vxpose.xlu0.b32.end [16/16] 0.0, 128
        %v1297 = vpop.trf.xlu0
        %v1298 = vpop.trf.xlu0
        %v1299 = vpop.trf.xlu0
        %v1300 = vpop.trf.xlu0
        %v1301 = vpop.trf.xlu0
        %v1302 = vpop.trf.xlu0
        %v1303 = vpop.trf.xlu0
        %v1304 = vpop.trf.xlu0
        %v1305 = vpop.trf.xlu0
        %v1306 = vpop.trf.xlu0
        %v1307 = vpop.trf.xlu0
        %v1308 = vpop.trf.xlu0
        %v1309 = vpop.trf.xlu0
        %v1310 = vpop.trf.xlu0
        %v1311 = vpop.trf.xlu0
        %v1312 = vpop.trf.xlu0
        %v1314 = vsel %vm236, %v1297, 0
        %1316 = vmatpush.msra.mxu0 0.0
        %1317 = vmatpush.msra.mxu0 0.0
        %1318 = vmatpush.msra.mxu0 0.0
        %1319 = vmatpush.msra.mxu0 0.0
        %1320 = vmatpush.msra.mxu0 0.0
        %1321 = vmatpush.msra.mxu0 0.0
        %1322 = vmatpush.msra.mxu0 0.0
        %1323 = vmatpush.msra.mxu0 0.0
        %1324 = vmatpush.msra.mxu0 0.0
        %1325 = vmatpush.msra.mxu0 0.0
        %1326 = vmatpush.msra.mxu0 0.0
        %1327 = vmatpush.msra.mxu0 0.0
        %1328 = vmatpush.msra.mxu0 0.0
        %1329 = vmatpush.msra.mxu0 0.0
        %1330 = vmatpush.msra.mxu0 0.0
        %1331 = vmatpush.msra.mxu0 %v201
        %1332 = vmatmul.f32.gmra.mxu0 %v1314
        %v1333 = vpop.f32.mrf.mxu0
        %v1334 = vadd.f32 0.0, %v1333
        %1335 = vdwg.mxu0
        %1336 = vmatpush.msra.mxu0 0.0
        %1337 = vmatpush.msra.mxu0 0.0
        %1338 = vmatpush.msra.mxu0 0.0
        %1339 = vmatpush.msra.mxu0 0.0
        %1340 = vmatpush.msra.mxu0 0.0
        %1341 = vmatpush.msra.mxu0 0.0
        %1342 = vmatpush.msra.mxu0 0.0
        %1343 = vmatpush.msra.mxu0 0.0
        %1344 = vmatpush.msra.mxu0 0.0
        %1345 = vmatpush.msra.mxu0 0.0
        %1346 = vmatpush.msra.mxu0 0.0
        %1347 = vmatpush.msra.mxu0 0.0
        %1348 = vmatpush.msra.mxu0 0.0
        %1349 = vmatpush.msra.mxu0 0.0
        %1350 = vmatpush.msra.mxu0 0.0
        %1351 = vmatpush.msra.mxu0 %v202
        %1352 = vmatmul.f32.gmra.mxu0 %v1314
        %v1353 = vpop.f32.mrf.mxu0
        %v1354 = vadd.f32 0.0, %v1353
        %1355 = vdwg.mxu0
        %1356 = vmatpush.msra.mxu0 0.0
        %1357 = vmatpush.msra.mxu0 0.0
        %1358 = vmatpush.msra.mxu0 0.0
        %1359 = vmatpush.msra.mxu0 0.0
        %1360 = vmatpush.msra.mxu0 0.0
        %1361 = vmatpush.msra.mxu0 0.0
        %1362 = vmatpush.msra.mxu0 0.0
        %1363 = vmatpush.msra.mxu0 0.0
        %1364 = vmatpush.msra.mxu0 0.0
        %1365 = vmatpush.msra.mxu0 0.0
        %1366 = vmatpush.msra.mxu0 0.0
        %1367 = vmatpush.msra.mxu0 0.0
        %1368 = vmatpush.msra.mxu0 0.0
        %1369 = vmatpush.msra.mxu0 0.0
        %1370 = vmatpush.msra.mxu0 0.0
        %1371 = vmatpush.msra.mxu0 %v1280
        %1372 = vmatmul.f32.gmra.mxu0 %v1314
        %v1373 = vpop.f32.mrf.mxu0
        %v1374 = vadd.f32 0.0, %v1373
        %1375 = vdwg.mxu0
        %v1376 = vmul.f32 %v1170, %v1334
        %v1377 = vmul.f32 %v1171, %v1354
        %v1379 = vsel %vm236, %v1374, 0
        %1381 = vmatpush.msra.mxu0 0.0
        %1382 = vmatpush.msra.mxu0 0.0
        %1383 = vmatpush.msra.mxu0 0.0
        %1384 = vmatpush.msra.mxu0 0.0
        %1385 = vmatpush.msra.mxu0 0.0
        %1386 = vmatpush.msra.mxu0 0.0
        %1387 = vmatpush.msra.mxu0 0.0
        %1388 = vmatpush.msra.mxu0 0.0
        %1389 = vmatpush.msra.mxu0 0.0
        %1390 = vmatpush.msra.mxu0 0.0
        %1391 = vmatpush.msra.mxu0 0.0
        %1392 = vmatpush.msra.mxu0 0.0
        %1393 = vmatpush.msra.mxu0 0.0
        %1394 = vmatpush.msra.mxu0 0.0
        %1395 = vmatpush.msra.mxu0 0.0
        %1396 = vmatpush.msra.mxu0 %v1170
        %1397 = vmatmul.f32.gmra.mxu0 %v1379
        %v1398 = vpop.f32.mrf.mxu0
        %v1399 = vadd.f32 1e-06, %v1398
        %1400 = vdwg.mxu0
        %1401 = vmatpush.msra.mxu0 0.0
        %1402 = vmatpush.msra.mxu0 0.0
        %1403 = vmatpush.msra.mxu0 0.0
        %1404 = vmatpush.msra.mxu0 0.0
        %1405 = vmatpush.msra.mxu0 0.0
        %1406 = vmatpush.msra.mxu0 0.0
        %1407 = vmatpush.msra.mxu0 0.0
        %1408 = vmatpush.msra.mxu0 0.0
        %1409 = vmatpush.msra.mxu0 0.0
        %1410 = vmatpush.msra.mxu0 0.0
        %1411 = vmatpush.msra.mxu0 0.0
        %1412 = vmatpush.msra.mxu0 0.0
        %1413 = vmatpush.msra.mxu0 0.0
        %1414 = vmatpush.msra.mxu0 0.0
        %1415 = vmatpush.msra.mxu0 0.0
        %1416 = vmatpush.msra.mxu0 %v1171
        %1417 = vmatmul.f32.gmra.mxu0 %v1379
        %v1418 = vpop.f32.mrf.mxu0
        %v1419 = vadd.f32 1e-06, %v1418
        %1420 = vdwg.mxu0
        %v1421 = vrcp.pop %v1399
        %v1422 = vrcp.pop %v1419
        %v1423 = vmul.f32 %v1399, %v1421
        %v1424 = vmul.f32 %v1419, %v1422
        %v1425 = vsub.f32 2.0, %v1423
        %v1426 = vsub.f32 2.0, %v1424
        %v1427 = vmul.f32 %v1421, %v1425
        %v1428 = vmul.f32 %v1422, %v1426
        %v1429 = vmul.f32 %v1376, %v1427
        %v1430 = vmul.f32 %v1377, %v1428
        %v1432 = vsel %vm236, %v1280, 0
        %1434 = vmatpush.msra.mxu0 0.0
        %1435 = vmatpush.msra.mxu0 0.0
        %1436 = vmatpush.msra.mxu0 0.0
        %1437 = vmatpush.msra.mxu0 0.0
        %1438 = vmatpush.msra.mxu0 0.0
        %1439 = vmatpush.msra.mxu0 0.0
        %1440 = vmatpush.msra.mxu0 0.0
        %1441 = vmatpush.msra.mxu0 0.0
        %1442 = vmatpush.msra.mxu0 0.0
        %1443 = vmatpush.msra.mxu0 0.0
        %1444 = vmatpush.msra.mxu0 0.0
        %1445 = vmatpush.msra.mxu0 0.0
        %1446 = vmatpush.msra.mxu0 0.0
        %1447 = vmatpush.msra.mxu0 0.0
        %1448 = vmatpush.msra.mxu0 0.0
        %1449 = vmatpush.msra.mxu0 %v1429
        %1450 = vmatmul.f32.gmra.mxu0 %v1432
        %v1451 = vpop.f32.mrf.mxu0
        %v1452 = vadd.f32 0.0, %v1451
        %1453 = vdwg.mxu0
        %1454 = vmatpush.msra.mxu0 0.0
        %1455 = vmatpush.msra.mxu0 0.0
        %1456 = vmatpush.msra.mxu0 0.0
        %1457 = vmatpush.msra.mxu0 0.0
        %1458 = vmatpush.msra.mxu0 0.0
        %1459 = vmatpush.msra.mxu0 0.0
        %1460 = vmatpush.msra.mxu0 0.0
        %1461 = vmatpush.msra.mxu0 0.0
        %1462 = vmatpush.msra.mxu0 0.0
        %1463 = vmatpush.msra.mxu0 0.0
        %1464 = vmatpush.msra.mxu0 0.0
        %1465 = vmatpush.msra.mxu0 0.0
        %1466 = vmatpush.msra.mxu0 0.0
        %1467 = vmatpush.msra.mxu0 0.0
        %1468 = vmatpush.msra.mxu0 0.0
        %1469 = vmatpush.msra.mxu0 %v1430
        %1470 = vmatmul.f32.gmra.mxu0 %v1432
        %v1471 = vpop.f32.mrf.mxu0
        %v1472 = vadd.f32 0.0, %v1471
        %1473 = vdwg.mxu0
        %1474 = vst [vmem:[%s200] sm:$0xff] %v1452
        %1475 = vst [vmem:[%s200 + $0x8] sm:$0xff] %v1472
        %s1476 = sand.u32 %s82, 1
        %s1477 = scalar_lea.sflag [#allocation4], %s1476
        %s1478 = sand.u32 %s82, 1
        %s1479 = smul.addr %s1478, 16
        %s1480 = scalar_lea.vmem [#allocation7], %s1479
        // Predicated region
        $region37: #{tpu_custom_call.1} parent=27 // pred_check
          %p1481 = pneg %p92
        $region38: #{tpu_custom_call.1} parent=27 // pred_check_branch
          %1483 = sbr.rel (%p1481) target = $region40
        $region39: #{tpu_custom_call.1} parent=27 // pred_region
          %1485 = vsyncadd %s1477, 0
          %s1486 = smul.addr %s22, 2
          %s1487 = smul.addr %s1486, 8
          %s1488 = scalar_lea.hbm %s2, %s1487
          %s1490 = sshll.u32 %s1480, 4
          %s1491 = int_to_ptr.vmem [resolvable:$true] %s1490
          %s1492 = sshll.u32 %s1488, 4
          %s1493 = int_to_ptr.hbm [resolvable:$true] %s1492
          %1495 = dma.vmem_to_hbm [thread:$0]  %s1491, 256, %s1493, %s1477
        $region40: #{tpu_custom_call.1} parent=27 // pred_fallthru
          _
      $region28: #{tpu_custom_call.1} parent=5 // pred_fallthru
        _
      %p1496 = scmp.le.s32.totalorder 2, %s17
      // Predicated region
      $region41: #{tpu_custom_call.1} parent=5 // pred_check
        %p1497 = pneg %p1496
      $region42: #{tpu_custom_call.1} parent=5 // pred_check_branch
        %1499 = sbr.rel (%p1497) target = $region44
      $region43: #{tpu_custom_call.1} parent=5 // pred_region
        %s1500 = ssub.s32 %s17, 2
        // Predicated region
        $region45: #{tpu_custom_call.1} parent=43 // pred_check
          %p1501 = pneg %p98
        $region46: #{tpu_custom_call.1} parent=43 // pred_check_branch
          %1503 = sbr.rel (%p1501) target = $region48
        $region47: #{tpu_custom_call.1} parent=43 // pred_region
          %s1504 = sand.u32 %s83, 1
          %s1505 = scalar_lea.sflag [#allocation4], %s1504
          %s1506 = sand.u32 %s83, 1
          %s1507 = smul.addr %s1506, 16
          %s1508 = scalar_lea.vmem [#allocation7], %s1507
          %1510 = dma.done %s1505, 256
        $region48: #{tpu_custom_call.1} parent=43 // pred_fallthru
          _
      $region44: #{tpu_custom_call.1} parent=5 // pred_fallthru
        _
    $region6: #{tpu_custom_call.1} parent=1 // loop_footer
      %s21 = sadd.s32 1, %s17
    $region7: #{tpu_custom_call.1} parent=1 // loop_footer_branch
      %16 = sbr.rel target = $region3
    $region8: #{tpu_custom_call.1} parent=1 // loop_exit
      _
    %1511 = vsyncpa [#allocation3], 1
    %s1512 = scalar_lea.sflag [#allocation3], 1
    %1513 = vsyncpa %s1512, 1
    %1514 = vsyncpa [#allocation6], 1
    %s1515 = scalar_lea.sflag [#allocation6], 1
    %1516 = vsyncpa %s1515, 1
    %1517 = vsyncpa [#allocation4], 1
    %s1518 = scalar_lea.sflag [#allocation4], 1
    %1519 = vsyncpa %s1518, 1

</llo_original>
